<compile_context>
chip_gen: v7x
topology: tpu7x:2x2x1
jax: 0.10.0
libtpu: 0.0.40
codegen_flags: <defaults>
</compile_context>

<pallas_src>
import functools

import jax
import jax.numpy as jnp
from jax import lax
from jax.experimental import pallas as pl
from jax.experimental.pallas import tpu as pltpu

_LAYERS = ("enc_1", "enc_2", "enc_3", "z_layer",
           "dec_1", "dec_2", "dec_3", "x_bar_layer")
_LANE = 128


def _round_up(n, m):
    return ((n + m - 1) // m) * m


def ae_kernel(
    x_ref,
    w_e1, b_e1, w_e2, b_e2, w_e3, b_e3, w_z, b_z,
    w_d1, b_d1, w_d2, b_d2, w_d3, b_d3, w_xb, b_xb,
    xbar_ref, h1_ref, h2_ref, h3_ref, z_ref,
):
    def linear(h, w_ref, b_ref):
        # MXU matmul in the weight dtype (f32 or bf16), f32 accumulation,
        # f32 bias broadcast-add.
        return (
            jnp.dot(h.astype(w_ref.dtype), w_ref[...],
                    preferred_element_type=jnp.float32)
            + b_ref[...]
        )

    def relu(h):
        # Keep ReLU in f32 on the accumulator (no bf16 VALU on v5e).
        return jnp.maximum(h, 0.0)

    # Encoder -- store each intermediate as soon as it exists so the live set
    # stays at ~2 activation tiles (no vreg spills).
    enc_h1 = relu(linear(x_ref[...], w_e1, b_e1))
    h1_ref[...] = enc_h1.astype(h1_ref.dtype)

    enc_h2 = relu(linear(enc_h1, w_e2, b_e2))
    h2_ref[...] = enc_h2.astype(h2_ref.dtype)

    enc_h3 = relu(linear(enc_h2, w_e3, b_e3))
    h3_ref[...] = enc_h3.astype(h3_ref.dtype)

    z = linear(enc_h3, w_z, b_z)
    z_ref[...] = z.astype(z_ref.dtype)

    # Decoder.
    dec_h1 = relu(linear(z, w_d1, b_d1))
    dec_h2 = relu(linear(dec_h1, w_d2, b_d2))
    dec_h3 = relu(linear(dec_h2, w_d3, b_d3))
    xbar_ref[...] = linear(dec_h3, w_xb, b_xb).astype(xbar_ref.dtype)


def _choose_batch_tiling(batch, block_b, sublane):
    """Pick (tb, b_pad): an even number of equal tiles when more than one tile
    is needed (balances v7x's 2 TensorCores), with minimal ragged padding."""
    max_tb = max(_round_up(block_b, sublane), sublane)
    if batch <= sublane:
        tb = sublane                                   # one tiny tile
    elif _round_up(batch, sublane) <= 2 * max_tb:
        # Exactly two tiles (one per TC on v7x), tightest covering size.
        tb = _round_up(pl.cdiv(batch, 2), sublane)
    else:
        n_tiles = pl.cdiv(batch, max_tb)
        n_tiles += n_tiles % 2                         # even tile count
        tb = _round_up(pl.cdiv(batch, n_tiles), sublane)
    b_pad = _round_up(batch, tb)
    return tb, b_pad


@functools.partial(jax.jit, static_argnames=("block_b", "compute_dtype"))
def ae_forward(x, params, *, block_b=512, compute_dtype=jnp.float32):
    """params: dict name -> (W[in,out] f32, b[1,out] f32).

    Returns the 5 PyTorch outputs: (x_bar, enc_h1, enc_h2, enc_h3, z), all f32.
    """
    compute_dtype = jnp.dtype(compute_dtype)
    B, F = x.shape

    # Logical (in, out) dims per layer, straight from the stored weights.
    layer_dims = [params[name][0].shape for name in _LAYERS]

    # Lane-pad every feature axis to a multiple of 128 (zero padding is exact:
    # zero weight rows/cols + zero bias keep padded lanes at exactly 0).
    f_pad = _round_up(F, _LANE)
    padded_dims = [(_round_up(i, _LANE), _round_up(o, _LANE)) for i, o in layer_dims]

    # Batch tile: 16-row multiples for bf16 (2 rows/sublane), 8 for f32.
    sublane = 16 if compute_dtype.itemsize < 4 else 8
    tb, b_pad = _choose_batch_tiling(B, block_b, sublane)

    x_p = jnp.pad(x.astype(compute_dtype), ((0, b_pad - B), (0, f_pad - F)))

    flat_params = []
    in_specs = [pl.BlockSpec((tb, f_pad), lambda i: (i, 0))]
    for name, (ip, op) in zip(_LAYERS, padded_dims):
        w, b = params[name]
        wi, wo = w.shape
        w_p = jnp.pad(w.astype(compute_dtype), ((0, ip - wi), (0, op - wo)))
        b_p = jnp.pad(b.astype(jnp.float32), ((0, 0), (0, op - wo)))
        flat_params += [w_p, b_p]
        # Constant index_map -> weights/biases stay VMEM-resident across grid
        # steps; single-buffered since the block never changes.
        in_specs += [
            pl.BlockSpec((ip, op), lambda i: (0, 0), pipeline_mode=pl.Buffered(1)),
            pl.BlockSpec((1, op), lambda i: (0, 0), pipeline_mode=pl.Buffered(1)),
        ]

    # Output order: x_bar, enc_h1, enc_h2, enc_h3, z.
    out_pads = (padded_dims[7][1], padded_dims[0][1], padded_dims[1][1],
                padded_dims[2][1], padded_dims[3][1])
    out_dims = (layer_dims[7][1], layer_dims[0][1], layer_dims[1][1],
                layer_dims[2][1], layer_dims[3][1])

    out_shapes = tuple(jax.ShapeDtypeStruct((b_pad, d), jnp.float32) for d in out_pads)
    out_specs = tuple(pl.BlockSpec((tb, d), lambda i: (i, 0)) for d in out_pads)

    # Advisory cost hint for XLA's scheduler.
    flops = 2 * b_pad * sum(ip * op for ip, op in padded_dims)
    param_bytes = sum(int(p.size) * p.dtype.itemsize for p in flat_params)
    out_bytes = sum(b_pad * d * 4 for d in out_pads)
    x_bytes = b_pad * f_pad * compute_dtype.itemsize
    cost = pl.CostEstimate(flops=flops, transcendentals=0,
                           bytes_accessed=x_bytes + param_bytes + out_bytes)

    outs = pl.pallas_call(
        ae_kernel,
        out_shape=out_shapes,
        grid=(b_pad // tb,),
        in_specs=in_specs,
        out_specs=out_specs,
        compiler_params=pltpu.CompilerParams(
            dimension_semantics=("parallel",),  # shards batch tiles on v7x's 2 TCs
        ),
        cost_estimate=cost,
    )(x_p, *flat_params)

    # Strip batch + lane padding.
    return tuple(o[:B, :d] for o, d in zip(outs, out_dims))


def init_params(key, n_enc_1, n_enc_2, n_enc_3, n_dec_1, n_dec_2, n_dec_3,
                n_input, n_z):
    """Deterministic PyTorch-Linear-style init; weights stored as (in, out)."""
    layer_dims = {
        "enc_1": (n_input, n_enc_1),
        "enc_2": (n_enc_1, n_enc_2),
        "enc_3": (n_enc_2, n_enc_3),
        "z_layer": (n_enc_3, n_z),
        "dec_1": (n_z, n_dec_1),
        "dec_2": (n_dec_1, n_dec_2),
        "dec_3": (n_dec_2, n_dec_3),
        "x_bar_layer": (n_dec_3, n_input),
    }
    params = {}
    for name, (fan_in, fan_out) in layer_dims.items():
        key, kw, kb = jax.random.split(key, 3)
        bound = 1.0 / jnp.sqrt(fan_in)
        w = jax.random.uniform(kw, (fan_in, fan_out), jnp.float32, -bound, bound)
        b = jax.random.uniform(kb, (1, fan_out), jnp.float32, -bound, bound)
        params[name] = (w, b)
    return params


def ae_reference(x, params, compute_dtype=jnp.float32):
    """Pure-JAX reference mirroring the kernel's dtype strategy."""
    compute_dtype = jnp.dtype(compute_dtype)

    def linear(h, name):
        w, b = params[name]
        return (jnp.dot(h.astype(compute_dtype), w.astype(compute_dtype),
                        preferred_element_type=jnp.float32,
                        precision=lax.Precision.HIGHEST) + b)

    enc_h1 = jax.nn.relu(linear(x, "enc_1"))
    enc_h2 = jax.nn.relu(linear(enc_h1, "enc_2"))
    enc_h3 = jax.nn.relu(linear(enc_h2, "enc_3"))
    z = linear(enc_h3, "z_layer")
    dec_h1 = jax.nn.relu(linear(z, "dec_1"))
    dec_h2 = jax.nn.relu(linear(dec_h1, "dec_2"))
    dec_h3 = jax.nn.relu(linear(dec_h2, "dec_3"))
    x_bar = linear(dec_h3, "x_bar_layer")
    return x_bar, enc_h1, enc_h2, enc_h3, z


if __name__ == "__main__":
    # Small AE config (IDEC-style AE shape-wise, but small).
    n_input, n_z = 32, 16
    n_enc_1, n_enc_2, n_enc_3 = 64, 64, 128
    n_dec_1, n_dec_2, n_dec_3 = 128, 64, 64
    batch = 300  # ragged -> exercises even-grid tiling + pad/slice

    key = jax.random.PRNGKey(0)
    key, kx = jax.random.split(key)
    x = jax.random.normal(kx, (batch, n_input), jnp.float32)

    params = init_params(key, n_enc_1, n_enc_2, n_enc_3,
                         n_dec_1, n_dec_2, n_dec_3, n_input, n_z)

    names = ("x_bar", "h1", "h2", "h3", "z")

    # --- f32 path (PyTorch semantics) ---------------------------------------
    outs = jax.block_until_ready(
        ae_forward(x, params, compute_dtype=jnp.float32))
    refs = ae_reference(x, params, jnp.float32)
    for name, o, r in zip(names, outs, refs):
        assert o.shape == r.shape and o.dtype == r.dtype, name
        assert jnp.allclose(o, r, atol=1e-3, rtol=1e-3), name

    # --- bf16-operand / f32-accumulation path (all TPU gens; v5e MXU is
    # bf16-native, so this is the fast path there too) -----------------------
    outs_bf = jax.block_until_ready(
        ae_forward(x, params, compute_dtype=jnp.bfloat16))
    refs_bf = ae_reference(x, params, jnp.bfloat16)
    for name, o, r in zip(names, outs_bf, refs_bf):
        assert o.shape == r.shape and o.dtype == r.dtype, name
        assert jnp.allclose(o, r, atol=2e-2, rtol=2e-2), name

    print("KERNEL_OK")
</pallas_src>

<mosaic_0001>
module attributes {stable_mosaic.version = 11 : i64} {
  func.func @ae_kernel(%arg0: i32, %arg1: memref<152x128xf32, #tpu.memory_space<vmem>>, %arg2: memref<128x128xf32, #tpu.memory_space<vmem>>, %arg3: memref<1x128xf32, #tpu.memory_space<vmem>>, %arg4: memref<128x128xf32, #tpu.memory_space<vmem>>, %arg5: memref<1x128xf32, #tpu.memory_space<vmem>>, %arg6: memref<128x128xf32, #tpu.memory_space<vmem>>, %arg7: memref<1x128xf32, #tpu.memory_space<vmem>>, %arg8: memref<128x128xf32, #tpu.memory_space<vmem>>, %arg9: memref<1x128xf32, #tpu.memory_space<vmem>>, %arg10: memref<128x128xf32, #tpu.memory_space<vmem>>, %arg11: memref<1x128xf32, #tpu.memory_space<vmem>>, %arg12: memref<128x128xf32, #tpu.memory_space<vmem>>, %arg13: memref<1x128xf32, #tpu.memory_space<vmem>>, %arg14: memref<128x128xf32, #tpu.memory_space<vmem>>, %arg15: memref<1x128xf32, #tpu.memory_space<vmem>>, %arg16: memref<128x128xf32, #tpu.memory_space<vmem>>, %arg17: memref<1x128xf32, #tpu.memory_space<vmem>>, %arg18: memref<152x128xf32, #tpu.memory_space<vmem>>, %arg19: memref<152x128xf32, #tpu.memory_space<vmem>>, %arg20: memref<152x128xf32, #tpu.memory_space<vmem>>, %arg21: memref<152x128xf32, #tpu.memory_space<vmem>>, %arg22: memref<152x128xf32, #tpu.memory_space<vmem>>) attributes {dimension_semantics = [#tpu.dimension_semantics<parallel>], iteration_bounds = array<i64: 2>, scalar_prefetch = 0 : i64, scratch_operands = 0 : i64, tpu.core_type = #tpu.core_type<tc>, window_params = [{transform_indices = @transform_0, window_bounds = array<i64: 152, 128>}, {pipeline_mode = #tpu.pipeline_mode<synchronous>, transform_indices = @transform_1, window_bounds = array<i64: 128, 128>}, {pipeline_mode = #tpu.pipeline_mode<synchronous>, transform_indices = @transform_2, window_bounds = array<i64: 1, 128>}, {pipeline_mode = #tpu.pipeline_mode<synchronous>, transform_indices = @transform_3, window_bounds = array<i64: 128, 128>}, {pipeline_mode = #tpu.pipeline_mode<synchronous>, transform_indices = @transform_4, window_bounds = array<i64: 1, 128>}, {pipeline_mode = #tpu.pipeline_mode<synchronous>, transform_indices = @transform_5, window_bounds = array<i64: 128, 128>}, {pipeline_mode = #tpu.pipeline_mode<synchronous>, transform_indices = @transform_6, window_bounds = array<i64: 1, 128>}, {pipeline_mode = #tpu.pipeline_mode<synchronous>, transform_indices = @transform_7, window_bounds = array<i64: 128, 128>}, {pipeline_mode = #tpu.pipeline_mode<synchronous>, transform_indices = @transform_8, window_bounds = array<i64: 1, 128>}, {pipeline_mode = #tpu.pipeline_mode<synchronous>, transform_indices = @transform_9, window_bounds = array<i64: 128, 128>}, {pipeline_mode = #tpu.pipeline_mode<synchronous>, transform_indices = @transform_10, window_bounds = array<i64: 1, 128>}, {pipeline_mode = #tpu.pipeline_mode<synchronous>, transform_indices = @transform_11, window_bounds = array<i64: 128, 128>}, {pipeline_mode = #tpu.pipeline_mode<synchronous>, transform_indices = @transform_12, window_bounds = array<i64: 1, 128>}, {pipeline_mode = #tpu.pipeline_mode<synchronous>, transform_indices = @transform_13, window_bounds = array<i64: 128, 128>}, {pipeline_mode = #tpu.pipeline_mode<synchronous>, transform_indices = @transform_14, window_bounds = array<i64: 1, 128>}, {pipeline_mode = #tpu.pipeline_mode<synchronous>, transform_indices = @transform_15, window_bounds = array<i64: 128, 128>}, {pipeline_mode = #tpu.pipeline_mode<synchronous>, transform_indices = @transform_16, window_bounds = array<i64: 1, 128>}, {transform_indices = @transform_17, window_bounds = array<i64: 152, 128>}, {transform_indices = @transform_18, window_bounds = array<i64: 152, 128>}, {transform_indices = @transform_19, window_bounds = array<i64: 152, 128>}, {transform_indices = @transform_20, window_bounds = array<i64: 152, 128>}, {transform_indices = @transform_21, window_bounds = array<i64: 152, 128>}]} {
    %c0 = arith.constant 0 : index
    %c0_0 = arith.constant 0 : index
    %0 = vector.load %arg1[%c0, %c0_0] : memref<152x128xf32, #tpu.memory_space<vmem>>, vector<152x128xf32>
    %c0_1 = arith.constant 0 : index
    %c0_2 = arith.constant 0 : index
    %1 = vector.load %arg2[%c0_1, %c0_2] : memref<128x128xf32, #tpu.memory_space<vmem>>, vector<128x128xf32>
    %cst = arith.constant dense<0.000000e+00> : vector<152x128xf32>
    %2 = tpu.matmul %0, %1, %cst {dimension_numbers = #tpu.dot_dimension_numbers<[1], [0], [0], [1], [0, 0, 1, 1], [], []>} : vector<152x128xf32>, vector<128x128xf32>, vector<152x128xf32> -> vector<152x128xf32>
    %c0_3 = arith.constant 0 : index
    %c0_4 = arith.constant 0 : index
    %3 = vector.load %arg3[%c0_3, %c0_4] : memref<1x128xf32, #tpu.memory_space<vmem>>, vector<1x128xf32>
    %4 = vector.broadcast %3 : vector<1x128xf32> to vector<152x128xf32>
    %5 = arith.addf %2, %4 : vector<152x128xf32>
    %cst_5 = arith.constant 0.000000e+00 : f32
    %6 = vector.broadcast %cst_5 : f32 to vector<152x128xf32>
    %7 = arith.maximumf %5, %6 : vector<152x128xf32>
    %c0_6 = arith.constant 0 : index
    %c0_7 = arith.constant 0 : index
    %8 = vector.load %arg19[%c0_6, %c0_7] : memref<152x128xf32, #tpu.memory_space<vmem>>, vector<152x128xf32>
    tpu.vector_store %arg19[%c0_6, %c0_7], %7 {strides = array<i32>} : memref<152x128xf32, #tpu.memory_space<vmem>>, vector<152x128xf32>,
    %c0_8 = arith.constant 0 : index
    %c0_9 = arith.constant 0 : index
    %9 = vector.load %arg4[%c0_8, %c0_9] : memref<128x128xf32, #tpu.memory_space<vmem>>, vector<128x128xf32>
    %cst_10 = arith.constant dense<0.000000e+00> : vector<152x128xf32>
    %10 = tpu.matmul %7, %9, %cst_10 {dimension_numbers = #tpu.dot_dimension_numbers<[1], [0], [0], [1], [0, 0, 1, 1], [], []>} : vector<152x128xf32>, vector<128x128xf32>, vector<152x128xf32> -> vector<152x128xf32>
    %c0_11 = arith.constant 0 : index
    %c0_12 = arith.constant 0 : index
    %11 = vector.load %arg5[%c0_11, %c0_12] : memref<1x128xf32, #tpu.memory_space<vmem>>, vector<1x128xf32>
    %12 = vector.broadcast %11 : vector<1x128xf32> to vector<152x128xf32>
    %13 = arith.addf %10, %12 : vector<152x128xf32>
    %cst_13 = arith.constant 0.000000e+00 : f32
    %14 = vector.broadcast %cst_13 : f32 to vector<152x128xf32>
    %15 = arith.maximumf %13, %14 : vector<152x128xf32>
    %c0_14 = arith.constant 0 : index
    %c0_15 = arith.constant 0 : index
    %16 = vector.load %arg20[%c0_14, %c0_15] : memref<152x128xf32, #tpu.memory_space<vmem>>, vector<152x128xf32>
    tpu.vector_store %arg20[%c0_14, %c0_15], %15 {strides = array<i32>} : memref<152x128xf32, #tpu.memory_space<vmem>>, vector<152x128xf32>,
    %c0_16 = arith.constant 0 : index
    %c0_17 = arith.constant 0 : index
    %17 = vector.load %arg6[%c0_16, %c0_17] : memref<128x128xf32, #tpu.memory_space<vmem>>, vector<128x128xf32>
    %cst_18 = arith.constant dense<0.000000e+00> : vector<152x128xf32>
    %18 = tpu.matmul %15, %17, %cst_18 {dimension_numbers = #tpu.dot_dimension_numbers<[1], [0], [0], [1], [0, 0, 1, 1], [], []>} : vector<152x128xf32>, vector<128x128xf32>, vector<152x128xf32> -> vector<152x128xf32>
    %c0_19 = arith.constant 0 : index
    %c0_20 = arith.constant 0 : index
    %19 = vector.load %arg7[%c0_19, %c0_20] : memref<1x128xf32, #tpu.memory_space<vmem>>, vector<1x128xf32>
    %20 = vector.broadcast %19 : vector<1x128xf32> to vector<152x128xf32>
    %21 = arith.addf %18, %20 : vector<152x128xf32>
    %cst_21 = arith.constant 0.000000e+00 : f32
    %22 = vector.broadcast %cst_21 : f32 to vector<152x128xf32>
    %23 = arith.maximumf %21, %22 : vector<152x128xf32>
    %c0_22 = arith.constant 0 : index
    %c0_23 = arith.constant 0 : index
    %24 = vector.load %arg21[%c0_22, %c0_23] : memref<152x128xf32, #tpu.memory_space<vmem>>, vector<152x128xf32>
    tpu.vector_store %arg21[%c0_22, %c0_23], %23 {strides = array<i32>} : memref<152x128xf32, #tpu.memory_space<vmem>>, vector<152x128xf32>,
    %c0_24 = arith.constant 0 : index
    %c0_25 = arith.constant 0 : index
    %25 = vector.load %arg8[%c0_24, %c0_25] : memref<128x128xf32, #tpu.memory_space<vmem>>, vector<128x128xf32>
    %cst_26 = arith.constant dense<0.000000e+00> : vector<152x128xf32>
    %26 = tpu.matmul %23, %25, %cst_26 {dimension_numbers = #tpu.dot_dimension_numbers<[1], [0], [0], [1], [0, 0, 1, 1], [], []>} : vector<152x128xf32>, vector<128x128xf32>, vector<152x128xf32> -> vector<152x128xf32>
    %c0_27 = arith.constant 0 : index
    %c0_28 = arith.constant 0 : index
    %27 = vector.load %arg9[%c0_27, %c0_28] : memref<1x128xf32, #tpu.memory_space<vmem>>, vector<1x128xf32>
    %28 = vector.broadcast %27 : vector<1x128xf32> to vector<152x128xf32>
    %29 = arith.addf %26, %28 : vector<152x128xf32>
    %c0_29 = arith.constant 0 : index
    %c0_30 = arith.constant 0 : index
    %30 = vector.load %arg22[%c0_29, %c0_30] : memref<152x128xf32, #tpu.memory_space<vmem>>, vector<152x128xf32>
    tpu.vector_store %arg22[%c0_29, %c0_30], %29 {strides = array<i32>} : memref<152x128xf32, #tpu.memory_space<vmem>>, vector<152x128xf32>,
    %c0_31 = arith.constant 0 : index
    %c0_32 = arith.constant 0 : index
    %31 = vector.load %arg10[%c0_31, %c0_32] : memref<128x128xf32, #tpu.memory_space<vmem>>, vector<128x128xf32>
    %cst_33 = arith.constant dense<0.000000e+00> : vector<152x128xf32>
    %32 = tpu.matmul %29, %31, %cst_33 {dimension_numbers = #tpu.dot_dimension_numbers<[1], [0], [0], [1], [0, 0, 1, 1], [], []>} : vector<152x128xf32>, vector<128x128xf32>, vector<152x128xf32> -> vector<152x128xf32>
    %c0_34 = arith.constant 0 : index
    %c0_35 = arith.constant 0 : index
    %33 = vector.load %arg11[%c0_34, %c0_35] : memref<1x128xf32, #tpu.memory_space<vmem>>, vector<1x128xf32>
    %34 = vector.broadcast %33 : vector<1x128xf32> to vector<152x128xf32>
    %35 = arith.addf %32, %34 : vector<152x128xf32>
    %cst_36 = arith.constant 0.000000e+00 : f32
    %36 = vector.broadcast %cst_36 : f32 to vector<152x128xf32>
    %37 = arith.maximumf %35, %36 : vector<152x128xf32>
    %c0_37 = arith.constant 0 : index
    %c0_38 = arith.constant 0 : index
    %38 = vector.load %arg12[%c0_37, %c0_38] : memref<128x128xf32, #tpu.memory_space<vmem>>, vector<128x128xf32>
    %cst_39 = arith.constant dense<0.000000e+00> : vector<152x128xf32>
    %39 = tpu.matmul %37, %38, %cst_39 {dimension_numbers = #tpu.dot_dimension_numbers<[1], [0], [0], [1], [0, 0, 1, 1], [], []>} : vector<152x128xf32>, vector<128x128xf32>, vector<152x128xf32> -> vector<152x128xf32>
    %c0_40 = arith.constant 0 : index
    %c0_41 = arith.constant 0 : index
    %40 = vector.load %arg13[%c0_40, %c0_41] : memref<1x128xf32, #tpu.memory_space<vmem>>, vector<1x128xf32>
    %41 = vector.broadcast %40 : vector<1x128xf32> to vector<152x128xf32>
    %42 = arith.addf %39, %41 : vector<152x128xf32>
    %cst_42 = arith.constant 0.000000e+00 : f32
    %43 = vector.broadcast %cst_42 : f32 to vector<152x128xf32>
    %44 = arith.maximumf %42, %43 : vector<152x128xf32>
    %c0_43 = arith.constant 0 : index
    %c0_44 = arith.constant 0 : index
    %45 = vector.load %arg14[%c0_43, %c0_44] : memref<128x128xf32, #tpu.memory_space<vmem>>, vector<128x128xf32>
    %cst_45 = arith.constant dense<0.000000e+00> : vector<152x128xf32>
    %46 = tpu.matmul %44, %45, %cst_45 {dimension_numbers = #tpu.dot_dimension_numbers<[1], [0], [0], [1], [0, 0, 1, 1], [], []>} : vector<152x128xf32>, vector<128x128xf32>, vector<152x128xf32> -> vector<152x128xf32>
    %c0_46 = arith.constant 0 : index
    %c0_47 = arith.constant 0 : index
    %47 = vector.load %arg15[%c0_46, %c0_47] : memref<1x128xf32, #tpu.memory_space<vmem>>, vector<1x128xf32>
    %48 = vector.broadcast %47 : vector<1x128xf32> to vector<152x128xf32>
    %49 = arith.addf %46, %48 : vector<152x128xf32>
    %cst_48 = arith.constant 0.000000e+00 : f32
    %50 = vector.broadcast %cst_48 : f32 to vector<152x128xf32>
    %51 = arith.maximumf %49, %50 : vector<152x128xf32>
    %c0_49 = arith.constant 0 : index
    %c0_50 = arith.constant 0 : index
    %52 = vector.load %arg16[%c0_49, %c0_50] : memref<128x128xf32, #tpu.memory_space<vmem>>, vector<128x128xf32>
    %cst_51 = arith.constant dense<0.000000e+00> : vector<152x128xf32>
    %53 = tpu.matmul %51, %52, %cst_51 {dimension_numbers = #tpu.dot_dimension_numbers<[1], [0], [0], [1], [0, 0, 1, 1], [], []>} : vector<152x128xf32>, vector<128x128xf32>, vector<152x128xf32> -> vector<152x128xf32>
    %c0_52 = arith.constant 0 : index
    %c0_53 = arith.constant 0 : index
    %54 = vector.load %arg17[%c0_52, %c0_53] : memref<1x128xf32, #tpu.memory_space<vmem>>, vector<1x128xf32>
    %55 = vector.broadcast %54 : vector<1x128xf32> to vector<152x128xf32>
    %56 = arith.addf %53, %55 : vector<152x128xf32>
    %c0_54 = arith.constant 0 : index
    %c0_55 = arith.constant 0 : index
    %57 = vector.load %arg18[%c0_54, %c0_55] : memref<152x128xf32, #tpu.memory_space<vmem>>, vector<152x128xf32>
    tpu.vector_store %arg18[%c0_54, %c0_55], %56 {strides = array<i32>} : memref<152x128xf32, #tpu.memory_space<vmem>>, vector<152x128xf32>,
    return
  }
  func.func @transform_0(%arg0: i32) -> (i32, i32) {
    %c0_i32 = arith.constant 0 : i32
    %c0_i32_0 = arith.constant 0 : i32
    return %arg0, %c0_i32 : i32, i32
  }
  func.func @transform_1(%arg0: i32) -> (i32, i32) {
    %c0_i32 = arith.constant 0 : i32
    %c0_i32_0 = arith.constant 0 : i32
    %c0_i32_1 = arith.constant 0 : i32
    return %c0_i32, %c0_i32_0 : i32, i32
  }
  func.func @transform_2(%arg0: i32) -> (i32, i32) {
    %c0_i32 = arith.constant 0 : i32
    %c0_i32_0 = arith.constant 0 : i32
    %c0_i32_1 = arith.constant 0 : i32
    return %c0_i32, %c0_i32_0 : i32, i32
  }
  func.func @transform_3(%arg0: i32) -> (i32, i32) {
    %c0_i32 = arith.constant 0 : i32
    %c0_i32_0 = arith.constant 0 : i32
    %c0_i32_1 = arith.constant 0 : i32
    return %c0_i32, %c0_i32_0 : i32, i32
  }
  func.func @transform_4(%arg0: i32) -> (i32, i32) {
    %c0_i32 = arith.constant 0 : i32
    %c0_i32_0 = arith.constant 0 : i32
    %c0_i32_1 = arith.constant 0 : i32
    return %c0_i32, %c0_i32_0 : i32, i32
  }
  func.func @transform_5(%arg0: i32) -> (i32, i32) {
    %c0_i32 = arith.constant 0 : i32
    %c0_i32_0 = arith.constant 0 : i32
    %c0_i32_1 = arith.constant 0 : i32
    return %c0_i32, %c0_i32_0 : i32, i32
  }
  func.func @transform_6(%arg0: i32) -> (i32, i32) {
    %c0_i32 = arith.constant 0 : i32
    %c0_i32_0 = arith.constant 0 : i32
    %c0_i32_1 = arith.constant 0 : i32
    return %c0_i32, %c0_i32_0 : i32, i32
  }
  func.func @transform_7(%arg0: i32) -> (i32, i32) {
    %c0_i32 = arith.constant 0 : i32
    %c0_i32_0 = arith.constant 0 : i32
    %c0_i32_1 = arith.constant 0 : i32
    return %c0_i32, %c0_i32_0 : i32, i32
  }
  func.func @transform_8(%arg0: i32) -> (i32, i32) {
    %c0_i32 = arith.constant 0 : i32
    %c0_i32_0 = arith.constant 0 : i32
    %c0_i32_1 = arith.constant 0 : i32
    return %c0_i32, %c0_i32_0 : i32, i32
  }
  func.func @transform_9(%arg0: i32) -> (i32, i32) {
    %c0_i32 = arith.constant 0 : i32
    %c0_i32_0 = arith.constant 0 : i32
    %c0_i32_1 = arith.constant 0 : i32
    return %c0_i32, %c0_i32_0 : i32, i32
  }
  func.func @transform_10(%arg0: i32) -> (i32, i32) {
    %c0_i32 = arith.constant 0 : i32
    %c0_i32_0 = arith.constant 0 : i32
    %c0_i32_1 = arith.constant 0 : i32
    return %c0_i32, %c0_i32_0 : i32, i32
  }
  func.func @transform_11(%arg0: i32) -> (i32, i32) {
    %c0_i32 = arith.constant 0 : i32
    %c0_i32_0 = arith.constant 0 : i32
    %c0_i32_1 = arith.constant 0 : i32
    return %c0_i32, %c0_i32_0 : i32, i32
  }
  func.func @transform_12(%arg0: i32) -> (i32, i32) {
    %c0_i32 = arith.constant 0 : i32
    %c0_i32_0 = arith.constant 0 : i32
    %c0_i32_1 = arith.constant 0 : i32
    return %c0_i32, %c0_i32_0 : i32, i32
  }
  func.func @transform_13(%arg0: i32) -> (i32, i32) {
    %c0_i32 = arith.constant 0 : i32
    %c0_i32_0 = arith.constant 0 : i32
    %c0_i32_1 = arith.constant 0 : i32
    return %c0_i32, %c0_i32_0 : i32, i32
  }
  func.func @transform_14(%arg0: i32) -> (i32, i32) {
    %c0_i32 = arith.constant 0 : i32
    %c0_i32_0 = arith.constant 0 : i32
    %c0_i32_1 = arith.constant 0 : i32
    return %c0_i32, %c0_i32_0 : i32, i32
  }
  func.func @transform_15(%arg0: i32) -> (i32, i32) {
    %c0_i32 = arith.constant 0 : i32
    %c0_i32_0 = arith.constant 0 : i32
    %c0_i32_1 = arith.constant 0 : i32
    return %c0_i32, %c0_i32_0 : i32, i32
  }
  func.func @transform_16(%arg0: i32) -> (i32, i32) {
    %c0_i32 = arith.constant 0 : i32
    %c0_i32_0 = arith.constant 0 : i32
    %c0_i32_1 = arith.constant 0 : i32
    return %c0_i32, %c0_i32_0 : i32, i32
  }
  func.func @transform_17(%arg0: i32) -> (i32, i32) {
    %c0_i32 = arith.constant 0 : i32
    %c0_i32_0 = arith.constant 0 : i32
    return %arg0, %c0_i32 : i32, i32
  }
  func.func @transform_18(%arg0: i32) -> (i32, i32) {
    %c0_i32 = arith.constant 0 : i32
    %c0_i32_0 = arith.constant 0 : i32
    return %arg0, %c0_i32 : i32, i32
  }
  func.func @transform_19(%arg0: i32) -> (i32, i32) {
    %c0_i32 = arith.constant 0 : i32
    %c0_i32_0 = arith.constant 0 : i32
    return %arg0, %c0_i32 : i32, i32
  }
  func.func @transform_20(%arg0: i32) -> (i32, i32) {
    %c0_i32 = arith.constant 0 : i32
    %c0_i32_0 = arith.constant 0 : i32
    return %arg0, %c0_i32 : i32, i32
  }
  func.func @transform_21(%arg0: i32) -> (i32, i32) {
    %c0_i32 = arith.constant 0 : i32
    %c0_i32_0 = arith.constant 0 : i32
    return %arg0, %c0_i32 : i32, i32
  }
}

</mosaic_0001>

<llo_original>
// kernel: ae_forward.1
$region0: #{ae_forward.1}
  #allocation0 [shape = 'u32[]', space=smem, size = 0x4, offset = 0x4, fixed_abs, tag = 'smem constant byte address 0x4 - core index']
  #allocation1 [shape = 'u32[144,128]{1,0:T(1,128)}', space=vmem, size = 0x12000, scoped, tag = 'internal scratch']
  %s0 = inlined_call_operand.vmem [shape: f32[304,128], index: 0, kind: input, shape index: {}]
  %s1 = inlined_call_operand.vmem [shape: f32[128,128], index: 1, kind: input, shape index: {}]
  %s2 = inlined_call_operand.vmem [shape: f32[1,128], index: 2, kind: input, shape index: {}]
  %s3 = inlined_call_operand.vmem [shape: f32[128,128], index: 3, kind: input, shape index: {}]
  %s4 = inlined_call_operand.vmem [shape: f32[1,128], index: 4, kind: input, shape index: {}]
  %s5 = inlined_call_operand.vmem [shape: f32[128,128], index: 5, kind: input, shape index: {}]
  %s6 = inlined_call_operand.vmem [shape: f32[1,128], index: 6, kind: input, shape index: {}]
  %s7 = inlined_call_operand.vmem [shape: f32[128,128], index: 7, kind: input, shape index: {}]
  %s8 = inlined_call_operand.vmem [shape: f32[1,128], index: 8, kind: input, shape index: {}]
  %s9 = inlined_call_operand.vmem [shape: f32[128,128], index: 9, kind: input, shape index: {}]
  %s10 = inlined_call_operand.vmem [shape: f32[1,128], index: 10, kind: input, shape index: {}]
  %s11 = inlined_call_operand.vmem [shape: f32[128,128], index: 11, kind: input, shape index: {}]
  %s12 = inlined_call_operand.vmem [shape: f32[1,128], index: 12, kind: input, shape index: {}]
  %s13 = inlined_call_operand.vmem [shape: f32[128,128], index: 13, kind: input, shape index: {}]
  %s14 = inlined_call_operand.vmem [shape: f32[1,128], index: 14, kind: input, shape index: {}]
  %s15 = inlined_call_operand.vmem [shape: f32[128,128], index: 15, kind: input, shape index: {}]
  %s16 = inlined_call_operand.vmem [shape: f32[1,128], index: 16, kind: input, shape index: {}]
  %s17 = inlined_call_operand.vmem [shape: f32[304,128], index: 17, kind: output, shape index: {0}]
  %s18 = inlined_call_operand.vmem [shape: f32[304,128], index: 18, kind: output, shape index: {1}]
  %s19 = inlined_call_operand.vmem [shape: f32[304,128], index: 19, kind: output, shape index: {2}]
  %s20 = inlined_call_operand.hbm [shape: f32[304,128], index: 20, kind: output, shape index: {3}]
  %s21 = inlined_call_operand.vmem [shape: f32[304,128], index: 21, kind: output, shape index: {4}]
  %22 = xla_tuple %s17, %s18, %s19, %s20, %s21
  %s23 = sld [smem:[#allocation0]]
  $region133: #{ae_forward.1} parent=0
    _
  %s25 = ssub.s32 1, %s23
  %s26 = scalar_select 0, %s25, %s23
  $region1: #{ae_forward.1} parent=0
    #allocation2 [shape = 'u8[155648]{0}', space=vmem, size = 0x26000, scoped, tag = 'output window, operand 3']
    #allocation3 [shape = 's32[2]{0}', space=sflag, size = 0x8, scoped, tag = 'scoped memory for ae_forward.1']
    %27 = vsyncpa [#allocation3], 0
    %s28 = scalar_lea.sflag [#allocation3], 1
    %29 = vsyncpa %s28, 0
    loop: start=0, step=1, limit=4
    $region2: #{ae_forward.1} parent=1 // loop_pre_header
      _
    $region3: #{ae_forward.1} parent=1 // loop_header
      %s31 = sphi 0, %s35
      %p32 = scmp.ge.s32.totalorder %s31, 4
      %s41 = sphi 0, %s43
      %s44 = sphi 0, %s41
      %s45 = sphi 0, %s44
      %s61 = sphi 0, %s45
      %s65 = sphi 0, %s65
      %s67 = sphi 0, %s65
      %s68 = sphi 0, %s67
      %s82 = sphi 0, %s68
      %s86 = sphi 0, %s86
      %s88 = sphi 0, %s86
      %s89 = sphi 0, %s88
      %s103 = sphi 0, %s89
      %s107 = sphi 0, %s107
      %s109 = sphi 0, %s107
      %s110 = sphi 0, %s109
      %s124 = sphi 0, %s110
      %s128 = sphi 0, %s128
      %s130 = sphi 0, %s128
      %s131 = sphi 0, %s130
      %s145 = sphi 0, %s131
      %s149 = sphi 0, %s149
      %s151 = sphi 0, %s149
      %s152 = sphi 0, %s151
      %s166 = sphi 0, %s152
      %s170 = sphi 0, %s170
      %s172 = sphi 0, %s170
      %s173 = sphi 0, %s172
      %s187 = sphi 0, %s173
      %s191 = sphi 0, %s191
      %s193 = sphi 0, %s191
      %s194 = sphi 0, %s193
      %s208 = sphi 0, %s194
      %s212 = sphi 0, %s212
      %s214 = sphi 0, %s212
      %s215 = sphi 0, %s214
      %s229 = sphi 0, %s215
      %s233 = sphi 0, %s233
      %s235 = sphi 0, %s233
      %s236 = sphi 0, %s235
      %s250 = sphi 0, %s236
      %s254 = sphi 0, %s254
      %s256 = sphi 0, %s254
      %s257 = sphi 0, %s256
      %s271 = sphi 0, %s257
      %s275 = sphi 0, %s275
      %s277 = sphi 0, %s275
      %s278 = sphi 0, %s277
      %s292 = sphi 0, %s278
      %s296 = sphi 0, %s296
      %s298 = sphi 0, %s296
      %s299 = sphi 0, %s298
      %s313 = sphi 0, %s299
      %s317 = sphi 0, %s317
      %s319 = sphi 0, %s317
      %s320 = sphi 0, %s319
      %s334 = sphi 0, %s320
      %s338 = sphi 0, %s338
      %s340 = sphi 0, %s338
      %s341 = sphi 0, %s340
      %s355 = sphi 0, %s341
      %s359 = sphi 0, %s359
      %s361 = sphi 0, %s359
      %s362 = sphi 0, %s361
      %s376 = sphi 0, %s362
      %s380 = sphi 0, %s380
      %s382 = sphi 0, %s380
      %s383 = sphi 0, %s382
      %s397 = sphi 0, %s383
      %s403 = sphi 0, %s405
      %s406 = sphi 0, %s403
      %s407 = sphi 0, %s406
      %s423 = sphi 0, %s407
      %s429 = sphi 0, %s431
      %s432 = sphi 0, %s429
      %s433 = sphi 0, %s432
      %s449 = sphi 0, %s433
      %s455 = sphi 0, %s457
      %s458 = sphi 0, %s455
      %s459 = sphi 0, %s458
      %s475 = sphi 0, %s459
      %s481 = sphi 0, %s483
      %s484 = sphi 0, %s481
      %s485 = sphi 0, %s484
      %s501 = sphi 0, %s485
      %s507 = sphi 0, %s509
      %s510 = sphi 0, %s507
      %s511 = sphi 0, %s510
      %s527 = sphi 0, %s511
    $region4: #{ae_forward.1} parent=1 // loop_header_branch
      %34 = sbr.rel (%p32) target = $region8
    $region5: #{ae_forward.1} parent=1 // loop_body
      %s36 = ssub.s32 %s31, 1
      %s37 = ssub.s32 %s31, 2
      %s38 = sadd.s32 %s31, 1
      %s39 = ssub.s32 %s31, %s38
      %p40 = scmp.eq.s32.totalorder %s39, 0
      %s42 = sadd.s32 %s41, 1
      %s43 = scalar_select %p40, %s41, %s42
      %p46 = pneg %p40
      %p47 = scmp.eq.s32.totalorder %s31, 1
      %p48 = por %p46, %p47
      %p49 = scmp.ne.s32.totalorder %s41, %s44
      %p50 = scmp.eq.s32.totalorder %s31, 0
      %p51 = por %p49, %p50
      %p52 = scmp.ne.s32.totalorder %s41, %s44
      %p53 = scmp.eq.s32.totalorder %s36, 1
      %p54 = por %p52, %p53
      %p55 = scmp.ne.s32.totalorder %s44, %s45
      %p56 = scmp.eq.s32.totalorder %s36, 0
      %p57 = por %p55, %p56
      %p58 = scmp.ne.s32.totalorder %s44, %s45
      %p59 = scmp.eq.s32.totalorder %s37, 1
      %p60 = por %p58, %p59
      %p62 = scmp.ne.s32.totalorder %s45, %s61
      %p63 = scmp.eq.s32.totalorder %s37, 0
      %p64 = por %p62, %p63
      %s66 = sadd.s32 %s65, 1
      %p69 = scmp.eq.s32.totalorder %s31, 1
      %p70 = scmp.ne.s32.totalorder %s65, %s67
      %p71 = scmp.eq.s32.totalorder %s31, 0
      %p72 = por %p70, %p71
      %p73 = scmp.ne.s32.totalorder %s65, %s67
      %p74 = scmp.eq.s32.totalorder %s36, 1
      %p75 = por %p73, %p74
      %p76 = scmp.ne.s32.totalorder %s67, %s68
      %p77 = scmp.eq.s32.totalorder %s36, 0
      %p78 = por %p76, %p77
      %p79 = scmp.ne.s32.totalorder %s67, %s68
      %p80 = scmp.eq.s32.totalorder %s37, 1
      %p81 = por %p79, %p80
      %p83 = scmp.ne.s32.totalorder %s68, %s82
      %p84 = scmp.eq.s32.totalorder %s37, 0
      %p85 = por %p83, %p84
      %s87 = sadd.s32 %s86, 1
      %p90 = scmp.eq.s32.totalorder %s31, 1
      %p91 = scmp.ne.s32.totalorder %s86, %s88
      %p92 = scmp.eq.s32.totalorder %s31, 0
      %p93 = por %p91, %p92
      %p94 = scmp.ne.s32.totalorder %s86, %s88
      %p95 = scmp.eq.s32.totalorder %s36, 1
      %p96 = por %p94, %p95
      %p97 = scmp.ne.s32.totalorder %s88, %s89
      %p98 = scmp.eq.s32.totalorder %s36, 0
      %p99 = por %p97, %p98
      %p100 = scmp.ne.s32.totalorder %s88, %s89
      %p101 = scmp.eq.s32.totalorder %s37, 1
      %p102 = por %p100, %p101
      %p104 = scmp.ne.s32.totalorder %s89, %s103
      %p105 = scmp.eq.s32.totalorder %s37, 0
      %p106 = por %p104, %p105
      %s108 = sadd.s32 %s107, 1
      %p111 = scmp.eq.s32.totalorder %s31, 1
      %p112 = scmp.ne.s32.totalorder %s107, %s109
      %p113 = scmp.eq.s32.totalorder %s31, 0
      %p114 = por %p112, %p113
      %p115 = scmp.ne.s32.totalorder %s107, %s109
      %p116 = scmp.eq.s32.totalorder %s36, 1
      %p117 = por %p115, %p116
      %p118 = scmp.ne.s32.totalorder %s109, %s110
      %p119 = scmp.eq.s32.totalorder %s36, 0
      %p120 = por %p118, %p119
      %p121 = scmp.ne.s32.totalorder %s109, %s110
      %p122 = scmp.eq.s32.totalorder %s37, 1
      %p123 = por %p121, %p122
      %p125 = scmp.ne.s32.totalorder %s110, %s124
      %p126 = scmp.eq.s32.totalorder %s37, 0
      %p127 = por %p125, %p126
      %s129 = sadd.s32 %s128, 1
      %p132 = scmp.eq.s32.totalorder %s31, 1
      %p133 = scmp.ne.s32.totalorder %s128, %s130
      %p134 = scmp.eq.s32.totalorder %s31, 0
      %p135 = por %p133, %p134
      %p136 = scmp.ne.s32.totalorder %s128, %s130
      %p137 = scmp.eq.s32.totalorder %s36, 1
      %p138 = por %p136, %p137
      %p139 = scmp.ne.s32.totalorder %s130, %s131
      %p140 = scmp.eq.s32.totalorder %s36, 0
      %p141 = por %p139, %p140
      %p142 = scmp.ne.s32.totalorder %s130, %s131
      %p143 = scmp.eq.s32.totalorder %s37, 1
      %p144 = por %p142, %p143
      %p146 = scmp.ne.s32.totalorder %s131, %s145
      %p147 = scmp.eq.s32.totalorder %s37, 0
      %p148 = por %p146, %p147
      %s150 = sadd.s32 %s149, 1
      %p153 = scmp.eq.s32.totalorder %s31, 1
      %p154 = scmp.ne.s32.totalorder %s149, %s151
      %p155 = scmp.eq.s32.totalorder %s31, 0
      %p156 = por %p154, %p155
      %p157 = scmp.ne.s32.totalorder %s149, %s151
      %p158 = scmp.eq.s32.totalorder %s36, 1
      %p159 = por %p157, %p158
      %p160 = scmp.ne.s32.totalorder %s151, %s152
      %p161 = scmp.eq.s32.totalorder %s36, 0
      %p162 = por %p160, %p161
      %p163 = scmp.ne.s32.totalorder %s151, %s152
      %p164 = scmp.eq.s32.totalorder %s37, 1
      %p165 = por %p163, %p164
      %p167 = scmp.ne.s32.totalorder %s152, %s166
      %p168 = scmp.eq.s32.totalorder %s37, 0
      %p169 = por %p167, %p168
      %s171 = sadd.s32 %s170, 1
      %p174 = scmp.eq.s32.totalorder %s31, 1
      %p175 = scmp.ne.s32.totalorder %s170, %s172
      %p176 = scmp.eq.s32.totalorder %s31, 0
      %p177 = por %p175, %p176
      %p178 = scmp.ne.s32.totalorder %s170, %s172
      %p179 = scmp.eq.s32.totalorder %s36, 1
      %p180 = por %p178, %p179
      %p181 = scmp.ne.s32.totalorder %s172, %s173
      %p182 = scmp.eq.s32.totalorder %s36, 0
      %p183 = por %p181, %p182
      %p184 = scmp.ne.s32.totalorder %s172, %s173
      %p185 = scmp.eq.s32.totalorder %s37, 1
      %p186 = por %p184, %p185
      %p188 = scmp.ne.s32.totalorder %s173, %s187
      %p189 = scmp.eq.s32.totalorder %s37, 0
      %p190 = por %p188, %p189
      %s192 = sadd.s32 %s191, 1
      %p195 = scmp.eq.s32.totalorder %s31, 1
      %p196 = scmp.ne.s32.totalorder %s191, %s193
      %p197 = scmp.eq.s32.totalorder %s31, 0
      %p198 = por %p196, %p197
      %p199 = scmp.ne.s32.totalorder %s191, %s193
      %p200 = scmp.eq.s32.totalorder %s36, 1
      %p201 = por %p199, %p200
      %p202 = scmp.ne.s32.totalorder %s193, %s194
      %p203 = scmp.eq.s32.totalorder %s36, 0
      %p204 = por %p202, %p203
      %p205 = scmp.ne.s32.totalorder %s193, %s194
      %p206 = scmp.eq.s32.totalorder %s37, 1
      %p207 = por %p205, %p206
      %p209 = scmp.ne.s32.totalorder %s194, %s208
      %p210 = scmp.eq.s32.totalorder %s37, 0
      %p211 = por %p209, %p210
      %s213 = sadd.s32 %s212, 1
      %p216 = scmp.eq.s32.totalorder %s31, 1
      %p217 = scmp.ne.s32.totalorder %s212, %s214
      %p218 = scmp.eq.s32.totalorder %s31, 0
      %p219 = por %p217, %p218
      %p220 = scmp.ne.s32.totalorder %s212, %s214
      %p221 = scmp.eq.s32.totalorder %s36, 1
      %p222 = por %p220, %p221
      %p223 = scmp.ne.s32.totalorder %s214, %s215
      %p224 = scmp.eq.s32.totalorder %s36, 0
      %p225 = por %p223, %p224
      %p226 = scmp.ne.s32.totalorder %s214, %s215
      %p227 = scmp.eq.s32.totalorder %s37, 1
      %p228 = por %p226, %p227
      %p230 = scmp.ne.s32.totalorder %s215, %s229
      %p231 = scmp.eq.s32.totalorder %s37, 0
      %p232 = por %p230, %p231
      %s234 = sadd.s32 %s233, 1
      %p237 = scmp.eq.s32.totalorder %s31, 1
      %p238 = scmp.ne.s32.totalorder %s233, %s235
      %p239 = scmp.eq.s32.totalorder %s31, 0
      %p240 = por %p238, %p239
      %p241 = scmp.ne.s32.totalorder %s233, %s235
      %p242 = scmp.eq.s32.totalorder %s36, 1
      %p243 = por %p241, %p242
      %p244 = scmp.ne.s32.totalorder %s235, %s236
      %p245 = scmp.eq.s32.totalorder %s36, 0
      %p246 = por %p244, %p245
      %p247 = scmp.ne.s32.totalorder %s235, %s236
      %p248 = scmp.eq.s32.totalorder %s37, 1
      %p249 = por %p247, %p248
      %p251 = scmp.ne.s32.totalorder %s236, %s250
      %p252 = scmp.eq.s32.totalorder %s37, 0
      %p253 = por %p251, %p252
      %s255 = sadd.s32 %s254, 1
      %p258 = scmp.eq.s32.totalorder %s31, 1
      %p259 = scmp.ne.s32.totalorder %s254, %s256
      %p260 = scmp.eq.s32.totalorder %s31, 0
      %p261 = por %p259, %p260
      %p262 = scmp.ne.s32.totalorder %s254, %s256
      %p263 = scmp.eq.s32.totalorder %s36, 1
      %p264 = por %p262, %p263
      %p265 = scmp.ne.s32.totalorder %s256, %s257
      %p266 = scmp.eq.s32.totalorder %s36, 0
      %p267 = por %p265, %p266
      %p268 = scmp.ne.s32.totalorder %s256, %s257
      %p269 = scmp.eq.s32.totalorder %s37, 1
      %p270 = por %p268, %p269
      %p272 = scmp.ne.s32.totalorder %s257, %s271
      %p273 = scmp.eq.s32.totalorder %s37, 0
      %p274 = por %p272, %p273
      %s276 = sadd.s32 %s275, 1
      %p279 = scmp.eq.s32.totalorder %s31, 1
      %p280 = scmp.ne.s32.totalorder %s275, %s277
      %p281 = scmp.eq.s32.totalorder %s31, 0
      %p282 = por %p280, %p281
      %p283 = scmp.ne.s32.totalorder %s275, %s277
      %p284 = scmp.eq.s32.totalorder %s36, 1
      %p285 = por %p283, %p284
      %p286 = scmp.ne.s32.totalorder %s277, %s278
      %p287 = scmp.eq.s32.totalorder %s36, 0
      %p288 = por %p286, %p287
      %p289 = scmp.ne.s32.totalorder %s277, %s278
      %p290 = scmp.eq.s32.totalorder %s37, 1
      %p291 = por %p289, %p290
      %p293 = scmp.ne.s32.totalorder %s278, %s292
      %p294 = scmp.eq.s32.totalorder %s37, 0
      %p295 = por %p293, %p294
      %s297 = sadd.s32 %s296, 1
      %p300 = scmp.eq.s32.totalorder %s31, 1
      %p301 = scmp.ne.s32.totalorder %s296, %s298
      %p302 = scmp.eq.s32.totalorder %s31, 0
      %p303 = por %p301, %p302
      %p304 = scmp.ne.s32.totalorder %s296, %s298
      %p305 = scmp.eq.s32.totalorder %s36, 1
      %p306 = por %p304, %p305
      %p307 = scmp.ne.s32.totalorder %s298, %s299
      %p308 = scmp.eq.s32.totalorder %s36, 0
      %p309 = por %p307, %p308
      %p310 = scmp.ne.s32.totalorder %s298, %s299
      %p311 = scmp.eq.s32.totalorder %s37, 1
      %p312 = por %p310, %p311
      %p314 = scmp.ne.s32.totalorder %s299, %s313
      %p315 = scmp.eq.s32.totalorder %s37, 0
      %p316 = por %p314, %p315
      %s318 = sadd.s32 %s317, 1
      %p321 = scmp.eq.s32.totalorder %s31, 1
      %p322 = scmp.ne.s32.totalorder %s317, %s319
      %p323 = scmp.eq.s32.totalorder %s31, 0
      %p324 = por %p322, %p323
      %p325 = scmp.ne.s32.totalorder %s317, %s319
      %p326 = scmp.eq.s32.totalorder %s36, 1
      %p327 = por %p325, %p326
      %p328 = scmp.ne.s32.totalorder %s319, %s320
      %p329 = scmp.eq.s32.totalorder %s36, 0
      %p330 = por %p328, %p329
      %p331 = scmp.ne.s32.totalorder %s319, %s320
      %p332 = scmp.eq.s32.totalorder %s37, 1
      %p333 = por %p331, %p332
      %p335 = scmp.ne.s32.totalorder %s320, %s334
      %p336 = scmp.eq.s32.totalorder %s37, 0
      %p337 = por %p335, %p336
      %s339 = sadd.s32 %s338, 1
      %p342 = scmp.eq.s32.totalorder %s31, 1
      %p343 = scmp.ne.s32.totalorder %s338, %s340
      %p344 = scmp.eq.s32.totalorder %s31, 0
      %p345 = por %p343, %p344
      %p346 = scmp.ne.s32.totalorder %s338, %s340
      %p347 = scmp.eq.s32.totalorder %s36, 1
      %p348 = por %p346, %p347
      %p349 = scmp.ne.s32.totalorder %s340, %s341
      %p350 = scmp.eq.s32.totalorder %s36, 0
      %p351 = por %p349, %p350
      %p352 = scmp.ne.s32.totalorder %s340, %s341
      %p353 = scmp.eq.s32.totalorder %s37, 1
      %p354 = por %p352, %p353
      %p356 = scmp.ne.s32.totalorder %s341, %s355
      %p357 = scmp.eq.s32.totalorder %s37, 0
      %p358 = por %p356, %p357
      %s360 = sadd.s32 %s359, 1
      %p363 = scmp.eq.s32.totalorder %s31, 1
      %p364 = scmp.ne.s32.totalorder %s359, %s361
      %p365 = scmp.eq.s32.totalorder %s31, 0
      %p366 = por %p364, %p365
      %p367 = scmp.ne.s32.totalorder %s359, %s361
      %p368 = scmp.eq.s32.totalorder %s36, 1
      %p369 = por %p367, %p368
      %p370 = scmp.ne.s32.totalorder %s361, %s362
      %p371 = scmp.eq.s32.totalorder %s36, 0
      %p372 = por %p370, %p371
      %p373 = scmp.ne.s32.totalorder %s361, %s362
      %p374 = scmp.eq.s32.totalorder %s37, 1
      %p375 = por %p373, %p374
      %p377 = scmp.ne.s32.totalorder %s362, %s376
      %p378 = scmp.eq.s32.totalorder %s37, 0
      %p379 = por %p377, %p378
      %s381 = sadd.s32 %s380, 1
      %p384 = scmp.eq.s32.totalorder %s31, 1
      %p385 = scmp.ne.s32.totalorder %s380, %s382
      %p386 = scmp.eq.s32.totalorder %s31, 0
      %p387 = por %p385, %p386
      %p388 = scmp.ne.s32.totalorder %s380, %s382
      %p389 = scmp.eq.s32.totalorder %s36, 1
      %p390 = por %p388, %p389
      %p391 = scmp.ne.s32.totalorder %s382, %s383
      %p392 = scmp.eq.s32.totalorder %s36, 0
      %p393 = por %p391, %p392
      %p394 = scmp.ne.s32.totalorder %s382, %s383
      %p395 = scmp.eq.s32.totalorder %s37, 1
      %p396 = por %p394, %p395
      %p398 = scmp.ne.s32.totalorder %s383, %s397
      %p399 = scmp.eq.s32.totalorder %s37, 0
      %p400 = por %p398, %p399
      %s401 = ssub.s32 %s31, %s38
      %p402 = scmp.eq.s32.totalorder %s401, 0
      %s404 = sadd.s32 %s403, 1
      %s405 = scalar_select %p402, %s403, %s404
      %p408 = pneg %p402
      %p409 = scmp.eq.s32.totalorder %s31, 1
      %p410 = por %p408, %p409
      %p411 = scmp.ne.s32.totalorder %s403, %s406
      %p412 = scmp.eq.s32.totalorder %s31, 0
      %p413 = por %p411, %p412
      %p414 = scmp.ne.s32.totalorder %s403, %s406
      %p415 = scmp.eq.s32.totalorder %s36, 1
      %p416 = por %p414, %p415
      %p417 = scmp.ne.s32.totalorder %s406, %s407
      %p418 = scmp.eq.s32.totalorder %s36, 0
      %p419 = por %p417, %p418
      %p420 = scmp.ne.s32.totalorder %s406, %s407
      %p421 = scmp.eq.s32.totalorder %s37, 1
      %p422 = por %p420, %p421
      %p424 = scmp.ne.s32.totalorder %s407, %s423
      %p425 = scmp.eq.s32.totalorder %s37, 0
      %p426 = por %p424, %p425
      %s427 = ssub.s32 %s31, %s38
      %p428 = scmp.eq.s32.totalorder %s427, 0
      %s430 = sadd.s32 %s429, 1
      %s431 = scalar_select %p428, %s429, %s430
      %p434 = pneg %p428
      %p435 = scmp.eq.s32.totalorder %s31, 1
      %p436 = por %p434, %p435
      %p437 = scmp.ne.s32.totalorder %s429, %s432
      %p438 = scmp.eq.s32.totalorder %s31, 0
      %p439 = por %p437, %p438
      %p440 = scmp.ne.s32.totalorder %s429, %s432
      %p441 = scmp.eq.s32.totalorder %s36, 1
      %p442 = por %p440, %p441
      %p443 = scmp.ne.s32.totalorder %s432, %s433
      %p444 = scmp.eq.s32.totalorder %s36, 0
      %p445 = por %p443, %p444
      %p446 = scmp.ne.s32.totalorder %s432, %s433
      %p447 = scmp.eq.s32.totalorder %s37, 1
      %p448 = por %p446, %p447
      %p450 = scmp.ne.s32.totalorder %s433, %s449
      %p451 = scmp.eq.s32.totalorder %s37, 0
      %p452 = por %p450, %p451
      %s453 = ssub.s32 %s31, %s38
      %p454 = scmp.eq.s32.totalorder %s453, 0
      %s456 = sadd.s32 %s455, 1
      %s457 = scalar_select %p454, %s455, %s456
      %p460 = pneg %p454
      %p461 = scmp.eq.s32.totalorder %s31, 1
      %p462 = por %p460, %p461
      %p463 = scmp.ne.s32.totalorder %s455, %s458
      %p464 = scmp.eq.s32.totalorder %s31, 0
      %p465 = por %p463, %p464
      %p466 = scmp.ne.s32.totalorder %s455, %s458
      %p467 = scmp.eq.s32.totalorder %s36, 1
      %p468 = por %p466, %p467
      %p469 = scmp.ne.s32.totalorder %s458, %s459
      %p470 = scmp.eq.s32.totalorder %s36, 0
      %p471 = por %p469, %p470
      %p472 = scmp.ne.s32.totalorder %s458, %s459
      %p473 = scmp.eq.s32.totalorder %s37, 1
      %p474 = por %p472, %p473
      %p476 = scmp.ne.s32.totalorder %s459, %s475
      %p477 = scmp.eq.s32.totalorder %s37, 0
      %p478 = por %p476, %p477
      %s479 = ssub.s32 %s31, %s38
      %p480 = scmp.eq.s32.totalorder %s479, 0
      %s482 = sadd.s32 %s481, 1
      %s483 = scalar_select %p480, %s481, %s482
      %p486 = pneg %p480
      %p487 = scmp.eq.s32.totalorder %s31, 1
      %p488 = por %p486, %p487
      %p489 = scmp.ne.s32.totalorder %s481, %s484
      %p490 = scmp.eq.s32.totalorder %s31, 0
      %p491 = por %p489, %p490
      %p492 = scmp.ne.s32.totalorder %s481, %s484
      %p493 = scmp.eq.s32.totalorder %s36, 1
      %p494 = por %p492, %p493
      %p495 = scmp.ne.s32.totalorder %s484, %s485
      %p496 = scmp.eq.s32.totalorder %s36, 0
      %p497 = por %p495, %p496
      %p498 = scmp.ne.s32.totalorder %s484, %s485
      %p499 = scmp.eq.s32.totalorder %s37, 1
      %p500 = por %p498, %p499
      %p502 = scmp.ne.s32.totalorder %s485, %s501
      %p503 = scmp.eq.s32.totalorder %s37, 0
      %p504 = por %p502, %p503
      %s505 = ssub.s32 %s31, %s38
      %p506 = scmp.eq.s32.totalorder %s505, 0
      %s508 = sadd.s32 %s507, 1
      %s509 = scalar_select %p506, %s507, %s508
      %p512 = pneg %p506
      %p513 = scmp.eq.s32.totalorder %s31, 1
      %p514 = por %p512, %p513
      %p515 = scmp.ne.s32.totalorder %s507, %s510
      %p516 = scmp.eq.s32.totalorder %s31, 0
      %p517 = por %p515, %p516
      %p518 = scmp.ne.s32.totalorder %s507, %s510
      %p519 = scmp.eq.s32.totalorder %s36, 1
      %p520 = por %p518, %p519
      %p521 = scmp.ne.s32.totalorder %s510, %s511
      %p522 = scmp.eq.s32.totalorder %s36, 0
      %p523 = por %p521, %p522
      %p524 = scmp.ne.s32.totalorder %s510, %s511
      %p525 = scmp.eq.s32.totalorder %s37, 1
      %p526 = por %p524, %p525
      %p528 = scmp.ne.s32.totalorder %s511, %s527
      %p529 = scmp.eq.s32.totalorder %s37, 0
      %p530 = por %p528, %p529
      %p531 = scmp.le.s32.totalorder 1, %s31
      %p532 = scmp.lt.s32.totalorder %s31, 3
      %p533 = pnand %p531, %p532
      %p534 = pneg %p533
      // Predicated region
      $region9: #{ae_forward.1} parent=5 // pred_check
        _
      $region10: #{ae_forward.1} parent=5 // pred_check_branch
        %536 = sbr.rel (%p533) target = $region12
      $region11: #{ae_forward.1} parent=5 // pred_region
        %s537 = ssub.s32 %s31, 1
        // Predicated region
        $region13: #{ae_forward.1} parent=11 // pred_check
          %p538 = pneg %p78
        $region14: #{ae_forward.1} parent=11 // pred_check_branch
          %540 = sbr.rel (%p538) target = $region16
        $region15: #{ae_forward.1} parent=11 // pred_region
          _
        $region16: #{ae_forward.1} parent=11 // pred_fallthru
          _
        // Predicated region
        $region17: #{ae_forward.1} parent=11 // pred_check
          %p541 = pneg %p99
        $region18: #{ae_forward.1} parent=11 // pred_check_branch
          %543 = sbr.rel (%p541) target = $region20
        $region19: #{ae_forward.1} parent=11 // pred_region
          _
        $region20: #{ae_forward.1} parent=11 // pred_fallthru
          _
        // Predicated region
        $region21: #{ae_forward.1} parent=11 // pred_check
          %p544 = pneg %p120
        $region22: #{ae_forward.1} parent=11 // pred_check_branch
          %546 = sbr.rel (%p544) target = $region24
        $region23: #{ae_forward.1} parent=11 // pred_region
          _
        $region24: #{ae_forward.1} parent=11 // pred_fallthru
          _
        // Predicated region
        $region25: #{ae_forward.1} parent=11 // pred_check
          %p547 = pneg %p141
        $region26: #{ae_forward.1} parent=11 // pred_check_branch
          %549 = sbr.rel (%p547) target = $region28
        $region27: #{ae_forward.1} parent=11 // pred_region
          _
        $region28: #{ae_forward.1} parent=11 // pred_fallthru
          _
        // Predicated region
        $region29: #{ae_forward.1} parent=11 // pred_check
          %p550 = pneg %p162
        $region30: #{ae_forward.1} parent=11 // pred_check_branch
          %552 = sbr.rel (%p550) target = $region32
        $region31: #{ae_forward.1} parent=11 // pred_region
          _
        $region32: #{ae_forward.1} parent=11 // pred_fallthru
          _
        // Predicated region
        $region33: #{ae_forward.1} parent=11 // pred_check
          %p553 = pneg %p183
        $region34: #{ae_forward.1} parent=11 // pred_check_branch
          %555 = sbr.rel (%p553) target = $region36
        $region35: #{ae_forward.1} parent=11 // pred_region
          _
        $region36: #{ae_forward.1} parent=11 // pred_fallthru
          _
        // Predicated region
        $region37: #{ae_forward.1} parent=11 // pred_check
          %p556 = pneg %p204
        $region38: #{ae_forward.1} parent=11 // pred_check_branch
          %558 = sbr.rel (%p556) target = $region40
        $region39: #{ae_forward.1} parent=11 // pred_region
          _
        $region40: #{ae_forward.1} parent=11 // pred_fallthru
          _
        // Predicated region
        $region41: #{ae_forward.1} parent=11 // pred_check
          %p559 = pneg %p225
        $region42: #{ae_forward.1} parent=11 // pred_check_branch
          %561 = sbr.rel (%p559) target = $region44
        $region43: #{ae_forward.1} parent=11 // pred_region
          _
        $region44: #{ae_forward.1} parent=11 // pred_fallthru
          _
        // Predicated region
        $region45: #{ae_forward.1} parent=11 // pred_check
          %p562 = pneg %p246
        $region46: #{ae_forward.1} parent=11 // pred_check_branch
          %564 = sbr.rel (%p562) target = $region48
        $region47: #{ae_forward.1} parent=11 // pred_region
          _
        $region48: #{ae_forward.1} parent=11 // pred_fallthru
          _
        // Predicated region
        $region49: #{ae_forward.1} parent=11 // pred_check
          %p565 = pneg %p267
        $region50: #{ae_forward.1} parent=11 // pred_check_branch
          %567 = sbr.rel (%p565) target = $region52
        $region51: #{ae_forward.1} parent=11 // pred_region
          _
        $region52: #{ae_forward.1} parent=11 // pred_fallthru
          _
        // Predicated region
        $region53: #{ae_forward.1} parent=11 // pred_check
          %p568 = pneg %p288
        $region54: #{ae_forward.1} parent=11 // pred_check_branch
          %570 = sbr.rel (%p568) target = $region56
        $region55: #{ae_forward.1} parent=11 // pred_region
          _
        $region56: #{ae_forward.1} parent=11 // pred_fallthru
          _
        // Predicated region
        $region57: #{ae_forward.1} parent=11 // pred_check
          %p571 = pneg %p309
        $region58: #{ae_forward.1} parent=11 // pred_check_branch
          %573 = sbr.rel (%p571) target = $region60
        $region59: #{ae_forward.1} parent=11 // pred_region
          _
        $region60: #{ae_forward.1} parent=11 // pred_fallthru
          _
        // Predicated region
        $region61: #{ae_forward.1} parent=11 // pred_check
          %p574 = pneg %p330
        $region62: #{ae_forward.1} parent=11 // pred_check_branch
          %576 = sbr.rel (%p574) target = $region64
        $region63: #{ae_forward.1} parent=11 // pred_region
          _
        $region64: #{ae_forward.1} parent=11 // pred_fallthru
          _
        // Predicated region
        $region65: #{ae_forward.1} parent=11 // pred_check
          %p577 = pneg %p351
        $region66: #{ae_forward.1} parent=11 // pred_check_branch
          %579 = sbr.rel (%p577) target = $region68
        $region67: #{ae_forward.1} parent=11 // pred_region
          _
        $region68: #{ae_forward.1} parent=11 // pred_fallthru
          _
        // Predicated region
        $region69: #{ae_forward.1} parent=11 // pred_check
          %p580 = pneg %p372
        $region70: #{ae_forward.1} parent=11 // pred_check_branch
          %582 = sbr.rel (%p580) target = $region72
        $region71: #{ae_forward.1} parent=11 // pred_region
          _
        $region72: #{ae_forward.1} parent=11 // pred_fallthru
          _
        // Predicated region
        $region73: #{ae_forward.1} parent=11 // pred_check
          %p583 = pneg %p393
        $region74: #{ae_forward.1} parent=11 // pred_check_branch
          %585 = sbr.rel (%p583) target = $region76
        $region75: #{ae_forward.1} parent=11 // pred_region
          _
        $region76: #{ae_forward.1} parent=11 // pred_fallthru
          _
      $region12: #{ae_forward.1} parent=5 // pred_fallthru
        _
      %p586 = scmp.lt.s32.totalorder %s31, 2
      // Predicated region
      $region77: #{ae_forward.1} parent=5 // pred_check
        %p587 = pneg %p586
      $region78: #{ae_forward.1} parent=5 // pred_check_branch
        %589 = sbr.rel (%p587) target = $region80
      $region79: #{ae_forward.1} parent=5 // pred_region
        // Predicated region
        $region81: #{ae_forward.1} parent=79 // pred_check
          %p590 = pneg %p51
        $region82: #{ae_forward.1} parent=79 // pred_check_branch
          %592 = sbr.rel (%p590) target = $region84
        $region83: #{ae_forward.1} parent=79 // pred_region
          %s593 = smul.u32 19, %s31
          %p594 = scmp.lt.s32.totalorder %s593, 37
          %s595 = scalar_select %p594, %s593, 37
          %s596 = smul.addr %s595, 8
          %s597 = scalar_lea.vmem %s0, %s596
          %s598 = smul.u32 19, %s31
        $region84: #{ae_forward.1} parent=79 // pred_fallthru
          _
      $region80: #{ae_forward.1} parent=5 // pred_fallthru
        _
      %p599 = scmp.le.s32.totalorder 1, %s31
      %p600 = scmp.lt.s32.totalorder %s31, 3
      %p601 = pnand %p599, %p600
      %p602 = pneg %p601
      // Predicated region
      $region85: #{ae_forward.1} parent=5 // pred_check
        _
      $region86: #{ae_forward.1} parent=5 // pred_check_branch
        %604 = sbr.rel (%p601) target = $region88
      $region87: #{ae_forward.1} parent=5 // pred_region
        %s605 = ssub.s32 %s31, 1
        %s606 = smul.u32 19, %s36
        %p607 = scmp.lt.s32.totalorder %s606, 37
        %s608 = scalar_select %p607, %s606, 37
        %s609 = smul.addr %s608, 8
        %s610 = scalar_lea.vmem %s0, %s609
        %p611 = pneg %p57
        %p612 = pneg %p54
        %p613 = pneg %p78
        %p614 = pneg %p75
        %p615 = pneg %p99
        %p616 = pneg %p96
        %p617 = pneg %p120
        %p618 = pneg %p117
        %p619 = pneg %p141
        %p620 = pneg %p138
        %p621 = pneg %p162
        %p622 = pneg %p159
        %p623 = pneg %p183
        %p624 = pneg %p180
        %p625 = pneg %p204
        %p626 = pneg %p201
        %p627 = pneg %p225
        %p628 = pneg %p222
        %p629 = pneg %p246
        %p630 = pneg %p243
        %p631 = pneg %p267
        %p632 = pneg %p264
        %p633 = pneg %p288
        %p634 = pneg %p285
        %p635 = pneg %p309
        %p636 = pneg %p306
        %p637 = pneg %p330
        %p638 = pneg %p327
        %p639 = pneg %p351
        %p640 = pneg %p348
        %p641 = pneg %p372
        %p642 = pneg %p369
        %p643 = pneg %p393
        %p644 = pneg %p390
        %p645 = pneg %p419
        %p646 = pneg %p416
        %s647 = smul.u32 19, %s36
        %p648 = scmp.lt.s32.totalorder %s647, 37
        %s649 = scalar_select %p648, %s647, 37
        %s650 = smul.addr %s649, 8
        %s651 = scalar_lea.vmem %s17, %s650
        %p652 = pneg %p445
        %p653 = pneg %p442
        %s654 = smul.u32 19, %s36
        %p655 = scmp.lt.s32.totalorder %s654, 37
        %s656 = scalar_select %p655, %s654, 37
        %s657 = smul.addr %s656, 8
        %s658 = scalar_lea.vmem %s18, %s657
        %p659 = pneg %p471
        %p660 = pneg %p468
        %s661 = smul.u32 19, %s36
        %p662 = scmp.lt.s32.totalorder %s661, 37
        %s663 = scalar_select %p662, %s661, 37
        %s664 = smul.addr %s663, 8
        %s665 = scalar_lea.vmem %s19, %s664
        %p666 = pneg %p497
        %p667 = pneg %p494
        %s668 = sand.u32 %s484, 1
        %s669 = scalar_lea.sflag [#allocation3], %s668
        %s670 = sand.u32 %s484, 1
        %s671 = smul.addr %s670, 152
        %s672 = scalar_lea.vmem [#allocation2], %s671
        %p673 = pneg %p523
        %p674 = pneg %p520
        %s675 = smul.u32 19, %s36
        %p676 = scmp.lt.s32.totalorder %s675, 37
        %s677 = scalar_select %p676, %s675, 37
        %s678 = smul.addr %s677, 8
        %s679 = scalar_lea.vmem %s21, %s678
        %s680 = smul.u32 19, %s36
        %p681 = scmp.lt.s32.totalorder %s680, 37
        %s682 = scalar_select %p681, %s680, 37
        %s683 = smul.addr %s682, 8
        %s684 = scalar_lea.vmem %s0, %s683
        %s685 = smul.u32 19, %s36
        %s686 = smul.u32 19, %s36
        %p687 = scmp.lt.s32.totalorder %s686, 37
        %s688 = scalar_select %p687, %s686, 37
        %s689 = smul.addr %s688, 8
        %s690 = scalar_lea.vmem %s17, %s689
        %s691 = smul.u32 19, %s36
        %s692 = smul.u32 19, %s36
        %p693 = scmp.lt.s32.totalorder %s692, 37
        %s694 = scalar_select %p693, %s692, 37
        %s695 = smul.addr %s694, 8
        %s696 = scalar_lea.vmem %s18, %s695
        %s697 = smul.u32 19, %s36
        %s698 = smul.u32 19, %s36
        %p699 = scmp.lt.s32.totalorder %s698, 37
        %s700 = scalar_select %p699, %s698, 37
        %s701 = smul.addr %s700, 8
        %s702 = scalar_lea.vmem %s19, %s701
        %s703 = smul.u32 19, %s36
        %s704 = smul.u32 19, %s36
        %s705 = smul.u32 19, %s36
        %p706 = scmp.lt.s32.totalorder %s705, 37
        %s707 = scalar_select %p706, %s705, 37
        %s708 = smul.addr %s707, 8
        %s709 = scalar_lea.vmem %s21, %s708
        %s710 = smul.u32 19, %s36
        %v711 = vld [vmem:[%s684] sm:$0xff]
        %v712 = vld [vmem:[%s684 + $0x8] sm:$0xff]
        %v713 = vld [vmem:[%s684 + $0x10] sm:$0xff]
        %v714 = vld [vmem:[%s684 + $0x18] sm:$0xff]
        %v715 = vld [vmem:[%s684 + $0x20] sm:$0xff]
        %v716 = vld [vmem:[%s684 + $0x28] sm:$0xff]
        %v717 = vld [vmem:[%s684 + $0x30] sm:$0xff]
        %v718 = vld [vmem:[%s684 + $0x38] sm:$0xff]
        %v719 = vld [vmem:[%s684 + $0x40] sm:$0xff]
        %v720 = vld [vmem:[%s684 + $0x48] sm:$0xff]
        %v721 = vld [vmem:[%s684 + $0x50] sm:$0xff]
        %v722 = vld [vmem:[%s684 + $0x58] sm:$0xff]
        %v723 = vld [vmem:[%s684 + $0x60] sm:$0xff]
        %v724 = vld [vmem:[%s684 + $0x68] sm:$0xff]
        %v725 = vld [vmem:[%s684 + $0x70] sm:$0xff]
        %v726 = vld [vmem:[%s684 + $0x78] sm:$0xff]
        %v727 = vld [vmem:[%s684 + $0x80] sm:$0xff]
        %v728 = vld [vmem:[%s684 + $0x88] sm:$0xff]
        %v729 = vld [vmem:[%s684 + $0x90] sm:$0xff]
        %v730 = vld [vmem:[%s1] sm:$0xff]
        %v731 = vld [vmem:[%s1 + $0x8] sm:$0xff]
        %v732 = vld [vmem:[%s1 + $0x10] sm:$0xff]
        %v733 = vld [vmem:[%s1 + $0x18] sm:$0xff]
        %v734 = vld [vmem:[%s1 + $0x20] sm:$0xff]
        %v735 = vld [vmem:[%s1 + $0x28] sm:$0xff]
        %v736 = vld [vmem:[%s1 + $0x30] sm:$0xff]
        %v737 = vld [vmem:[%s1 + $0x38] sm:$0xff]
        %v738 = vld [vmem:[%s1 + $0x40] sm:$0xff]
        %v739 = vld [vmem:[%s1 + $0x48] sm:$0xff]
        %v740 = vld [vmem:[%s1 + $0x50] sm:$0xff]
        %v741 = vld [vmem:[%s1 + $0x58] sm:$0xff]
        %v742 = vld [vmem:[%s1 + $0x60] sm:$0xff]
        %v743 = vld [vmem:[%s1 + $0x68] sm:$0xff]
        %v744 = vld [vmem:[%s1 + $0x70] sm:$0xff]
        %v745 = vld [vmem:[%s1 + $0x78] sm:$0xff]
        %v746 = vld [vmem:[%s2] sm:$0x1]
        %v748 = vlaneseq
        %v749 = vshrl.u32 %v748, 7
        %v750 = vsub.s32 0, %v749
        %v751 = vrot.slane %v746, %v750
        %753 = vmatprep.subr.mxu0 0.0
        %754 = vmatpush1.msra.mxu0 %v730
        %755 = vmatprep.subr.mxu0 0.0
        %756 = vmatpush1.msra.mxu0 %v731
        %757 = vmatprep.subr.mxu0 0.0
        %758 = vmatpush1.msra.mxu0 %v732
        %759 = vmatprep.subr.mxu0 0.0
        %760 = vmatpush1.msra.mxu0 %v733
        %761 = vmatprep.subr.mxu0 0.0
        %762 = vmatpush1.msra.mxu0 %v734
        %763 = vmatprep.subr.mxu0 0.0
        %764 = vmatpush1.msra.mxu0 %v735
        %765 = vmatprep.subr.mxu0 0.0
        %766 = vmatpush1.msra.mxu0 %v736
        %767 = vmatprep.subr.mxu0 0.0
        %768 = vmatpush1.msra.mxu0 %v737
        %769 = vmatprep.subr.mxu0 0.0
        %770 = vmatpush1.msra.mxu0 %v738
        %771 = vmatprep.subr.mxu0 0.0
        %772 = vmatpush1.msra.mxu0 %v739
        %773 = vmatprep.subr.mxu0 0.0
        %774 = vmatpush1.msra.mxu0 %v740
        %775 = vmatprep.subr.mxu0 0.0
        %776 = vmatpush1.msra.mxu0 %v741
        %777 = vmatprep.subr.mxu0 0.0
        %778 = vmatpush1.msra.mxu0 %v742
        %779 = vmatprep.subr.mxu0 0.0
        %780 = vmatpush1.msra.mxu0 %v743
        %781 = vmatprep.subr.mxu0 0.0
        %782 = vmatpush1.msra.mxu0 %v744
        %783 = vmatprep.subr.mxu0 0.0
        %784 = vmatpush1.msra.mxu0 %v745
        %785 = vmatprep.subr.mxu0 0.0
        %786 = vmatpush1.msra.mxu0 0.0
        %787 = vmatprep.subr.mxu0 0.0
        %788 = vmatpush1.msra.mxu0 0.0
        %789 = vmatprep.subr.mxu0 0.0
        %790 = vmatpush1.msra.mxu0 0.0
        %791 = vmatprep.subr.mxu0 0.0
        %792 = vmatpush1.msra.mxu0 0.0
        %793 = vmatprep.subr.mxu0 0.0
        %794 = vmatpush1.msra.mxu0 0.0
        %795 = vmatprep.subr.mxu0 0.0
        %796 = vmatpush1.msra.mxu0 0.0
        %797 = vmatprep.subr.mxu0 0.0
        %798 = vmatpush1.msra.mxu0 0.0
        %799 = vmatprep.subr.mxu0 0.0
        %800 = vmatpush1.msra.mxu0 0.0
        %801 = vmatprep.subr.mxu0 0.0
        %802 = vmatpush1.msra.mxu0 0.0
        %803 = vmatprep.subr.mxu0 0.0
        %804 = vmatpush1.msra.mxu0 0.0
        %805 = vmatprep.subr.mxu0 0.0
        %806 = vmatpush1.msra.mxu0 0.0
        %807 = vmatprep.subr.mxu0 0.0
        %808 = vmatpush1.msra.mxu0 0.0
        %809 = vmatprep.subr.mxu0 0.0
        %810 = vmatpush1.msra.mxu0 0.0
        %811 = vmatprep.subr.mxu0 0.0
        %812 = vmatpush1.msra.mxu0 0.0
        %813 = vmatprep.subr.mxu0 0.0
        %814 = vmatpush1.msra.mxu0 0.0
        %815 = vmatprep.subr.mxu0 0.0
        %816 = vmatpush1.msra.mxu0 0.0
        %817 = vmatprep.mubr.f32.mxu0 0.0
        %818 = vmatmul.mubr.f32.gmra.mrb[0].mxu0 %v711
        %v819 = vpop.f32.mrb[0].mxu0
        %v820 = vadd.f32 %v751, %v819
        %v821 = vpop.f32.mrb[0].mxu0
        %822 = vmatprep.mubr.f32.mxu0 0.0
        %823 = vmatmul.mubr.f32.gmra.mrb[0].mxu0 %v712
        %v824 = vpop.f32.mrb[0].mxu0
        %v825 = vadd.f32 %v751, %v824
        %v826 = vpop.f32.mrb[0].mxu0
        %827 = vmatprep.mubr.f32.mxu0 0.0
        %828 = vmatmul.mubr.f32.gmra.mrb[0].mxu0 %v713
        %v829 = vpop.f32.mrb[0].mxu0
        %v830 = vadd.f32 %v751, %v829
        %v831 = vpop.f32.mrb[0].mxu0
        %832 = vmatprep.mubr.f32.mxu0 0.0
        %833 = vmatmul.mubr.f32.gmra.mrb[0].mxu0 %v714
        %v834 = vpop.f32.mrb[0].mxu0
        %v835 = vadd.f32 %v751, %v834
        %v836 = vpop.f32.mrb[0].mxu0
        %837 = vmatprep.mubr.f32.mxu0 0.0
        %838 = vmatmul.mubr.f32.gmra.mrb[0].mxu0 %v715
        %v839 = vpop.f32.mrb[0].mxu0
        %v840 = vadd.f32 %v751, %v839
        %v841 = vpop.f32.mrb[0].mxu0
        %842 = vmatprep.mubr.f32.mxu0 0.0
        %843 = vmatmul.mubr.f32.gmra.mrb[0].mxu0 %v716
        %v844 = vpop.f32.mrb[0].mxu0
        %v845 = vadd.f32 %v751, %v844
        %v846 = vpop.f32.mrb[0].mxu0
        %847 = vmatprep.mubr.f32.mxu0 0.0
        %848 = vmatmul.mubr.f32.gmra.mrb[0].mxu0 %v717
        %v849 = vpop.f32.mrb[0].mxu0
        %v850 = vadd.f32 %v751, %v849
        %v851 = vpop.f32.mrb[0].mxu0
        %852 = vmatprep.mubr.f32.mxu0 0.0
        %853 = vmatmul.mubr.f32.gmra.mrb[0].mxu0 %v718
        %v854 = vpop.f32.mrb[0].mxu0
        %v855 = vadd.f32 %v751, %v854
        %v856 = vpop.f32.mrb[0].mxu0
        %857 = vmatprep.mubr.f32.mxu0 0.0
        %858 = vmatmul.mubr.f32.gmra.mrb[0].mxu0 %v719
        %v859 = vpop.f32.mrb[0].mxu0
        %v860 = vadd.f32 %v751, %v859
        %v861 = vpop.f32.mrb[0].mxu0
        %862 = vmatprep.mubr.f32.mxu0 0.0
        %863 = vmatmul.mubr.f32.gmra.mrb[0].mxu0 %v720
        %v864 = vpop.f32.mrb[0].mxu0
        %v865 = vadd.f32 %v751, %v864
        %v866 = vpop.f32.mrb[0].mxu0
        %867 = vmatprep.mubr.f32.mxu0 0.0
        %868 = vmatmul.mubr.f32.gmra.mrb[0].mxu0 %v721
        %v869 = vpop.f32.mrb[0].mxu0
        %v870 = vadd.f32 %v751, %v869
        %v871 = vpop.f32.mrb[0].mxu0
        %872 = vmatprep.mubr.f32.mxu0 0.0
        %873 = vmatmul.mubr.f32.gmra.mrb[0].mxu0 %v722
        %v874 = vpop.f32.mrb[0].mxu0
        %v875 = vadd.f32 %v751, %v874
        %v876 = vpop.f32.mrb[0].mxu0
        %877 = vmatprep.mubr.f32.mxu0 0.0
        %878 = vmatmul.mubr.f32.gmra.mrb[0].mxu0 %v723
        %v879 = vpop.f32.mrb[0].mxu0
        %v880 = vadd.f32 %v751, %v879
        %v881 = vpop.f32.mrb[0].mxu0
        %882 = vmatprep.mubr.f32.mxu0 0.0
        %883 = vmatmul.mubr.f32.gmra.mrb[0].mxu0 %v724
        %v884 = vpop.f32.mrb[0].mxu0
        %v885 = vadd.f32 %v751, %v884
        %v886 = vpop.f32.mrb[0].mxu0
        %887 = vmatprep.mubr.f32.mxu0 0.0
        %888 = vmatmul.mubr.f32.gmra.mrb[0].mxu0 %v725
        %v889 = vpop.f32.mrb[0].mxu0
        %v890 = vadd.f32 %v751, %v889
        %v891 = vpop.f32.mrb[0].mxu0
        %892 = vmatprep.mubr.f32.mxu0 0.0
        %893 = vmatmul.mubr.f32.gmra.mrb[0].mxu0 %v726
        %v894 = vpop.f32.mrb[0].mxu0
        %v895 = vadd.f32 %v751, %v894
        %v896 = vpop.f32.mrb[0].mxu0
        %897 = vmatprep.mubr.f32.mxu0 0.0
        %898 = vmatmul.mubr.f32.gmra.mrb[0].mxu0 %v727
        %v899 = vpop.f32.mrb[0].mxu0
        %v900 = vadd.f32 %v751, %v899
        %v901 = vpop.f32.mrb[0].mxu0
        %902 = vmatprep.mubr.f32.mxu0 0.0
        %903 = vmatmul.mubr.f32.gmra.mrb[0].mxu0 %v728
        %v904 = vpop.f32.mrb[0].mxu0
        %v905 = vadd.f32 %v751, %v904
        %v906 = vpop.f32.mrb[0].mxu0
        %907 = vmatprep.mubr.f32.mxu0 0.0
        %908 = vmatmul.mubr.f32.gmra.mrb[0].mxu0 %v729
        %v909 = vpop.f32.mrb[0].mxu0
        %v910 = vadd.f32 %v751, %v909
        %v911 = vpop.f32.mrb[0].mxu0
        %912 = vdwg.mxu0
        %v913 = vmax.f32 %v820, 0.0
        %v914 = vmax.f32 %v825, 0.0
        %v915 = vmax.f32 %v830, 0.0
        %v916 = vmax.f32 %v835, 0.0
        %v917 = vmax.f32 %v840, 0.0
        %v918 = vmax.f32 %v845, 0.0
        %v919 = vmax.f32 %v850, 0.0
        %v920 = vmax.f32 %v855, 0.0
        %v921 = vmax.f32 %v860, 0.0
        %v922 = vmax.f32 %v865, 0.0
        %v923 = vmax.f32 %v870, 0.0
        %v924 = vmax.f32 %v875, 0.0
        %v925 = vmax.f32 %v880, 0.0
        %v926 = vmax.f32 %v885, 0.0
        %v927 = vmax.f32 %v890, 0.0
        %v928 = vmax.f32 %v895, 0.0
        %v929 = vmax.f32 %v900, 0.0
        %v930 = vmax.f32 %v905, 0.0
        %v931 = vmax.f32 %v910, 0.0
        %932 = vst [vmem:[%s696] sm:$0xff] %v913
        %933 = vst [vmem:[%s696 + $0x8] sm:$0xff] %v914
        %934 = vst [vmem:[%s696 + $0x10] sm:$0xff] %v915
        %935 = vst [vmem:[%s696 + $0x18] sm:$0xff] %v916
        %936 = vst [vmem:[%s696 + $0x20] sm:$0xff] %v917
        %937 = vst [vmem:[%s696 + $0x28] sm:$0xff] %v918
        %938 = vst [vmem:[%s696 + $0x30] sm:$0xff] %v919
        %939 = vst [vmem:[%s696 + $0x38] sm:$0xff] %v920
        %940 = vst [vmem:[%s696 + $0x40] sm:$0xff] %v921
        %941 = vst [vmem:[%s696 + $0x48] sm:$0xff] %v922
        %942 = vst [vmem:[%s696 + $0x50] sm:$0xff] %v923
        %943 = vst [vmem:[%s696 + $0x58] sm:$0xff] %v924
        %944 = vst [vmem:[%s696 + $0x60] sm:$0xff] %v925
        %945 = vst [vmem:[%s696 + $0x68] sm:$0xff] %v926
        %946 = vst [vmem:[%s696 + $0x70] sm:$0xff] %v927
        %947 = vst [vmem:[%s696 + $0x78] sm:$0xff] %v928
        %948 = vst [vmem:[%s696 + $0x80] sm:$0xff] %v929
        %949 = vst [vmem:[%s696 + $0x88] sm:$0xff] %v930
        %950 = vst [vmem:[%s696 + $0x90] sm:$0xff] %v931
        %v951 = vld [vmem:[%s3] sm:$0xff]
        %v952 = vld [vmem:[%s3 + $0x8] sm:$0xff]
        %v953 = vld [vmem:[%s3 + $0x10] sm:$0xff]
        %v954 = vld [vmem:[%s3 + $0x18] sm:$0xff]
        %v955 = vld [vmem:[%s3 + $0x20] sm:$0xff]
        %v956 = vld [vmem:[%s3 + $0x28] sm:$0xff]
        %v957 = vld [vmem:[%s3 + $0x30] sm:$0xff]
        %v958 = vld [vmem:[%s3 + $0x38] sm:$0xff]
        %v959 = vld [vmem:[%s3 + $0x40] sm:$0xff]
        %v960 = vld [vmem:[%s3 + $0x48] sm:$0xff]
        %v961 = vld [vmem:[%s3 + $0x50] sm:$0xff]
        %v962 = vld [vmem:[%s3 + $0x58] sm:$0xff]
        %v963 = vld [vmem:[%s3 + $0x60] sm:$0xff]
        %v964 = vld [vmem:[%s3 + $0x68] sm:$0xff]
        %v965 = vld [vmem:[%s3 + $0x70] sm:$0xff]
        %v966 = vld [vmem:[%s3 + $0x78] sm:$0xff]
        %v967 = vld [vmem:[%s4] sm:$0x1]
        %v969 = vlaneseq
        %v970 = vshrl.u32 %v969, 7
        %v971 = vsub.s32 0, %v970
        %v972 = vrot.slane %v967, %v971
        %974 = vmatprep.subr.mxu0 0.0
        %975 = vmatpush1.msra.mxu0 %v951
        %976 = vmatprep.subr.mxu0 0.0
        %977 = vmatpush1.msra.mxu0 %v952
        %978 = vmatprep.subr.mxu0 0.0
        %979 = vmatpush1.msra.mxu0 %v953
        %980 = vmatprep.subr.mxu0 0.0
        %981 = vmatpush1.msra.mxu0 %v954
        %982 = vmatprep.subr.mxu0 0.0
        %983 = vmatpush1.msra.mxu0 %v955
        %984 = vmatprep.subr.mxu0 0.0
        %985 = vmatpush1.msra.mxu0 %v956
        %986 = vmatprep.subr.mxu0 0.0
        %987 = vmatpush1.msra.mxu0 %v957
        %988 = vmatprep.subr.mxu0 0.0
        %989 = vmatpush1.msra.mxu0 %v958
        %990 = vmatprep.subr.mxu0 0.0
        %991 = vmatpush1.msra.mxu0 %v959
        %992 = vmatprep.subr.mxu0 0.0
        %993 = vmatpush1.msra.mxu0 %v960
        %994 = vmatprep.subr.mxu0 0.0
        %995 = vmatpush1.msra.mxu0 %v961
        %996 = vmatprep.subr.mxu0 0.0
        %997 = vmatpush1.msra.mxu0 %v962
        %998 = vmatprep.subr.mxu0 0.0
        %999 = vmatpush1.msra.mxu0 %v963
        %1000 = vmatprep.subr.mxu0 0.0
        %1001 = vmatpush1.msra.mxu0 %v964
        %1002 = vmatprep.subr.mxu0 0.0
        %1003 = vmatpush1.msra.mxu0 %v965
        %1004 = vmatprep.subr.mxu0 0.0
        %1005 = vmatpush1.msra.mxu0 %v966
        %1006 = vmatprep.subr.mxu0 0.0
        %1007 = vmatpush1.msra.mxu0 0.0
        %1008 = vmatprep.subr.mxu0 0.0
        %1009 = vmatpush1.msra.mxu0 0.0
        %1010 = vmatprep.subr.mxu0 0.0
        %1011 = vmatpush1.msra.mxu0 0.0
        %1012 = vmatprep.subr.mxu0 0.0
        %1013 = vmatpush1.msra.mxu0 0.0
        %1014 = vmatprep.subr.mxu0 0.0
        %1015 = vmatpush1.msra.mxu0 0.0
        %1016 = vmatprep.subr.mxu0 0.0
        %1017 = vmatpush1.msra.mxu0 0.0
        %1018 = vmatprep.subr.mxu0 0.0
        %1019 = vmatpush1.msra.mxu0 0.0
        %1020 = vmatprep.subr.mxu0 0.0
        %1021 = vmatpush1.msra.mxu0 0.0
        %1022 = vmatprep.subr.mxu0 0.0
        %1023 = vmatpush1.msra.mxu0 0.0
        %1024 = vmatprep.subr.mxu0 0.0
        %1025 = vmatpush1.msra.mxu0 0.0
        %1026 = vmatprep.subr.mxu0 0.0
        %1027 = vmatpush1.msra.mxu0 0.0
        %1028 = vmatprep.subr.mxu0 0.0
        %1029 = vmatpush1.msra.mxu0 0.0
        %1030 = vmatprep.subr.mxu0 0.0
        %1031 = vmatpush1.msra.mxu0 0.0
        %1032 = vmatprep.subr.mxu0 0.0
        %1033 = vmatpush1.msra.mxu0 0.0
        %1034 = vmatprep.subr.mxu0 0.0
        %1035 = vmatpush1.msra.mxu0 0.0
        %1036 = vmatprep.subr.mxu0 0.0
        %1037 = vmatpush1.msra.mxu0 0.0
        %1038 = vmatprep.mubr.f32.mxu0 0.0
        %1039 = vmatmul.mubr.f32.gmra.mrb[0].mxu0 %v913
        %v1040 = vpop.f32.mrb[0].mxu0
        %v1041 = vadd.f32 %v972, %v1040
        %v1042 = vpop.f32.mrb[0].mxu0
        %1043 = vmatprep.mubr.f32.mxu0 0.0
        %1044 = vmatmul.mubr.f32.gmra.mrb[0].mxu0 %v914
        %v1045 = vpop.f32.mrb[0].mxu0
        %v1046 = vadd.f32 %v972, %v1045
        %v1047 = vpop.f32.mrb[0].mxu0
        %1048 = vmatprep.mubr.f32.mxu0 0.0
        %1049 = vmatmul.mubr.f32.gmra.mrb[0].mxu0 %v915
        %v1050 = vpop.f32.mrb[0].mxu0
        %v1051 = vadd.f32 %v972, %v1050
        %v1052 = vpop.f32.mrb[0].mxu0
        %1053 = vmatprep.mubr.f32.mxu0 0.0
        %1054 = vmatmul.mubr.f32.gmra.mrb[0].mxu0 %v916
        %v1055 = vpop.f32.mrb[0].mxu0
        %v1056 = vadd.f32 %v972, %v1055
        %v1057 = vpop.f32.mrb[0].mxu0
        %1058 = vmatprep.mubr.f32.mxu0 0.0
        %1059 = vmatmul.mubr.f32.gmra.mrb[0].mxu0 %v917
        %v1060 = vpop.f32.mrb[0].mxu0
        %v1061 = vadd.f32 %v972, %v1060
        %v1062 = vpop.f32.mrb[0].mxu0
        %1063 = vmatprep.mubr.f32.mxu0 0.0
        %1064 = vmatmul.mubr.f32.gmra.mrb[0].mxu0 %v918
        %v1065 = vpop.f32.mrb[0].mxu0
        %v1066 = vadd.f32 %v972, %v1065
        %v1067 = vpop.f32.mrb[0].mxu0
        %1068 = vmatprep.mubr.f32.mxu0 0.0
        %1069 = vmatmul.mubr.f32.gmra.mrb[0].mxu0 %v919
        %v1070 = vpop.f32.mrb[0].mxu0
        %v1071 = vadd.f32 %v972, %v1070
        %v1072 = vpop.f32.mrb[0].mxu0
        %1073 = vmatprep.mubr.f32.mxu0 0.0
        %1074 = vmatmul.mubr.f32.gmra.mrb[0].mxu0 %v920
        %v1075 = vpop.f32.mrb[0].mxu0
        %v1076 = vadd.f32 %v972, %v1075
        %v1077 = vpop.f32.mrb[0].mxu0
        %1078 = vmatprep.mubr.f32.mxu0 0.0
        %1079 = vmatmul.mubr.f32.gmra.mrb[0].mxu0 %v921
        %v1080 = vpop.f32.mrb[0].mxu0
        %v1081 = vadd.f32 %v972, %v1080
        %v1082 = vpop.f32.mrb[0].mxu0
        %1083 = vmatprep.mubr.f32.mxu0 0.0
        %1084 = vmatmul.mubr.f32.gmra.mrb[0].mxu0 %v922
        %v1085 = vpop.f32.mrb[0].mxu0
        %v1086 = vadd.f32 %v972, %v1085
        %v1087 = vpop.f32.mrb[0].mxu0
        %1088 = vmatprep.mubr.f32.mxu0 0.0
        %1089 = vmatmul.mubr.f32.gmra.mrb[0].mxu0 %v923
        %v1090 = vpop.f32.mrb[0].mxu0
        %v1091 = vadd.f32 %v972, %v1090
        %v1092 = vpop.f32.mrb[0].mxu0
        %1093 = vmatprep.mubr.f32.mxu0 0.0
        %1094 = vmatmul.mubr.f32.gmra.mrb[0].mxu0 %v924
        %v1095 = vpop.f32.mrb[0].mxu0
        %v1096 = vadd.f32 %v972, %v1095
        %v1097 = vpop.f32.mrb[0].mxu0
        %1098 = vmatprep.mubr.f32.mxu0 0.0
        %1099 = vmatmul.mubr.f32.gmra.mrb[0].mxu0 %v925
        %v1100 = vpop.f32.mrb[0].mxu0
        %v1101 = vadd.f32 %v972, %v1100
        %v1102 = vpop.f32.mrb[0].mxu0
        %1103 = vmatprep.mubr.f32.mxu0 0.0
        %1104 = vmatmul.mubr.f32.gmra.mrb[0].mxu0 %v926
        %v1105 = vpop.f32.mrb[0].mxu0
        %v1106 = vadd.f32 %v972, %v1105
        %v1107 = vpop.f32.mrb[0].mxu0
        %1108 = vmatprep.mubr.f32.mxu0 0.0
        %1109 = vmatmul.mubr.f32.gmra.mrb[0].mxu0 %v927
        %v1110 = vpop.f32.mrb[0].mxu0
        %v1111 = vadd.f32 %v972, %v1110
        %v1112 = vpop.f32.mrb[0].mxu0
        %1113 = vmatprep.mubr.f32.mxu0 0.0
        %1114 = vmatmul.mubr.f32.gmra.mrb[0].mxu0 %v928
        %v1115 = vpop.f32.mrb[0].mxu0
        %v1116 = vadd.f32 %v972, %v1115
        %v1117 = vpop.f32.mrb[0].mxu0
        %1118 = vmatprep.mubr.f32.mxu0 0.0
        %1119 = vmatmul.mubr.f32.gmra.mrb[0].mxu0 %v929
        %v1120 = vpop.f32.mrb[0].mxu0
        %v1121 = vadd.f32 %v972, %v1120
        %v1122 = vpop.f32.mrb[0].mxu0
        %1123 = vmatprep.mubr.f32.mxu0 0.0
        %1124 = vmatmul.mubr.f32.gmra.mrb[0].mxu0 %v930
        %v1125 = vpop.f32.mrb[0].mxu0
        %v1126 = vadd.f32 %v972, %v1125
        %v1127 = vpop.f32.mrb[0].mxu0
        %1128 = vmatprep.mubr.f32.mxu0 0.0
        %1129 = vmatmul.mubr.f32.gmra.mrb[0].mxu0 %v931
        %v1130 = vpop.f32.mrb[0].mxu0
        %v1131 = vadd.f32 %v972, %v1130
        %v1132 = vpop.f32.mrb[0].mxu0
        %1133 = vdwg.mxu0
        %v1134 = vmax.f32 %v1041, 0.0
        %v1135 = vmax.f32 %v1046, 0.0
        %v1136 = vmax.f32 %v1051, 0.0
        %v1137 = vmax.f32 %v1056, 0.0
        %v1138 = vmax.f32 %v1061, 0.0
        %v1139 = vmax.f32 %v1066, 0.0
        %v1140 = vmax.f32 %v1071, 0.0
        %v1141 = vmax.f32 %v1076, 0.0
        %v1142 = vmax.f32 %v1081, 0.0
        %v1143 = vmax.f32 %v1086, 0.0
        %v1144 = vmax.f32 %v1091, 0.0
        %v1145 = vmax.f32 %v1096, 0.0
        %v1146 = vmax.f32 %v1101, 0.0
        %v1147 = vmax.f32 %v1106, 0.0
        %v1148 = vmax.f32 %v1111, 0.0
        %v1149 = vmax.f32 %v1116, 0.0
        %v1150 = vmax.f32 %v1121, 0.0
        %v1151 = vmax.f32 %v1126, 0.0
        %v1152 = vmax.f32 %v1131, 0.0
        %1153 = vst [vmem:[%s702] sm:$0xff] %v1134
        %1154 = vst [vmem:[%s702 + $0x8] sm:$0xff] %v1135
        %1155 = vst [vmem:[%s702 + $0x10] sm:$0xff] %v1136
        %1156 = vst [vmem:[%s702 + $0x18] sm:$0xff] %v1137
        %1157 = vst [vmem:[%s702 + $0x20] sm:$0xff] %v1138
        %1158 = vst [vmem:[%s702 + $0x28] sm:$0xff] %v1139
        %1159 = vst [vmem:[%s702 + $0x30] sm:$0xff] %v1140
        %1160 = vst [vmem:[%s702 + $0x38] sm:$0xff] %v1141
        %1161 = vst [vmem:[%s702 + $0x40] sm:$0xff] %v1142
        %1162 = vst [vmem:[%s702 + $0x48] sm:$0xff] %v1143
        %1163 = vst [vmem:[%s702 + $0x50] sm:$0xff] %v1144
        %1164 = vst [vmem:[%s702 + $0x58] sm:$0xff] %v1145
        %1165 = vst [vmem:[%s702 + $0x60] sm:$0xff] %v1146
        %1166 = vst [vmem:[%s702 + $0x68] sm:$0xff] %v1147
        %1167 = vst [vmem:[%s702 + $0x70] sm:$0xff] %v1148
        %1168 = vst [vmem:[%s702 + $0x78] sm:$0xff] %v1149
        %1169 = vst [vmem:[%s702 + $0x80] sm:$0xff] %v1150
        %1170 = vst [vmem:[%s702 + $0x88] sm:$0xff] %v1151
        %1171 = vst [vmem:[%s702 + $0x90] sm:$0xff] %v1152
        %v1172 = vld [vmem:[%s5] sm:$0xff]
        %v1173 = vld [vmem:[%s5 + $0x8] sm:$0xff]
        %v1174 = vld [vmem:[%s5 + $0x10] sm:$0xff]
        %v1175 = vld [vmem:[%s5 + $0x18] sm:$0xff]
        %v1176 = vld [vmem:[%s5 + $0x20] sm:$0xff]
        %v1177 = vld [vmem:[%s5 + $0x28] sm:$0xff]
        %v1178 = vld [vmem:[%s5 + $0x30] sm:$0xff]
        %v1179 = vld [vmem:[%s5 + $0x38] sm:$0xff]
        %v1180 = vld [vmem:[%s5 + $0x40] sm:$0xff]
        %v1181 = vld [vmem:[%s5 + $0x48] sm:$0xff]
        %v1182 = vld [vmem:[%s5 + $0x50] sm:$0xff]
        %v1183 = vld [vmem:[%s5 + $0x58] sm:$0xff]
        %v1184 = vld [vmem:[%s5 + $0x60] sm:$0xff]
        %v1185 = vld [vmem:[%s5 + $0x68] sm:$0xff]
        %v1186 = vld [vmem:[%s5 + $0x70] sm:$0xff]
        %v1187 = vld [vmem:[%s5 + $0x78] sm:$0xff]
        %v1188 = vld [vmem:[%s6] sm:$0x1]
        %v1190 = vlaneseq
        %v1191 = vshrl.u32 %v1190, 7
        %v1192 = vsub.s32 0, %v1191
        %v1193 = vrot.slane %v1188, %v1192
        %1195 = vmatprep.subr.mxu0 0.0
        %1196 = vmatpush1.msra.mxu0 %v1172
        %1197 = vmatprep.subr.mxu0 0.0
        %1198 = vmatpush1.msra.mxu0 %v1173
        %1199 = vmatprep.subr.mxu0 0.0
        %1200 = vmatpush1.msra.mxu0 %v1174
        %1201 = vmatprep.subr.mxu0 0.0
        %1202 = vmatpush1.msra.mxu0 %v1175
        %1203 = vmatprep.subr.mxu0 0.0
        %1204 = vmatpush1.msra.mxu0 %v1176
        %1205 = vmatprep.subr.mxu0 0.0
        %1206 = vmatpush1.msra.mxu0 %v1177
        %1207 = vmatprep.subr.mxu0 0.0
        %1208 = vmatpush1.msra.mxu0 %v1178
        %1209 = vmatprep.subr.mxu0 0.0
        %1210 = vmatpush1.msra.mxu0 %v1179
        %1211 = vmatprep.subr.mxu0 0.0
        %1212 = vmatpush1.msra.mxu0 %v1180
        %1213 = vmatprep.subr.mxu0 0.0
        %1214 = vmatpush1.msra.mxu0 %v1181
        %1215 = vmatprep.subr.mxu0 0.0
        %1216 = vmatpush1.msra.mxu0 %v1182
        %1217 = vmatprep.subr.mxu0 0.0
        %1218 = vmatpush1.msra.mxu0 %v1183
        %1219 = vmatprep.subr.mxu0 0.0
        %1220 = vmatpush1.msra.mxu0 %v1184
        %1221 = vmatprep.subr.mxu0 0.0
        %1222 = vmatpush1.msra.mxu0 %v1185
        %1223 = vmatprep.subr.mxu0 0.0
        %1224 = vmatpush1.msra.mxu0 %v1186
        %1225 = vmatprep.subr.mxu0 0.0
        %1226 = vmatpush1.msra.mxu0 %v1187
        %1227 = vmatprep.subr.mxu0 0.0
        %1228 = vmatpush1.msra.mxu0 0.0
        %1229 = vmatprep.subr.mxu0 0.0
        %1230 = vmatpush1.msra.mxu0 0.0
        %1231 = vmatprep.subr.mxu0 0.0
        %1232 = vmatpush1.msra.mxu0 0.0
        %1233 = vmatprep.subr.mxu0 0.0
        %1234 = vmatpush1.msra.mxu0 0.0
        %1235 = vmatprep.subr.mxu0 0.0
        %1236 = vmatpush1.msra.mxu0 0.0
        %1237 = vmatprep.subr.mxu0 0.0
        %1238 = vmatpush1.msra.mxu0 0.0
        %1239 = vmatprep.subr.mxu0 0.0
        %1240 = vmatpush1.msra.mxu0 0.0
        %1241 = vmatprep.subr.mxu0 0.0
        %1242 = vmatpush1.msra.mxu0 0.0
        %1243 = vmatprep.subr.mxu0 0.0
        %1244 = vmatpush1.msra.mxu0 0.0
        %1245 = vmatprep.subr.mxu0 0.0
        %1246 = vmatpush1.msra.mxu0 0.0
        %1247 = vmatprep.subr.mxu0 0.0
        %1248 = vmatpush1.msra.mxu0 0.0
        %1249 = vmatprep.subr.mxu0 0.0
        %1250 = vmatpush1.msra.mxu0 0.0
        %1251 = vmatprep.subr.mxu0 0.0
        %1252 = vmatpush1.msra.mxu0 0.0
        %1253 = vmatprep.subr.mxu0 0.0
        %1254 = vmatpush1.msra.mxu0 0.0
        %1255 = vmatprep.subr.mxu0 0.0
        %1256 = vmatpush1.msra.mxu0 0.0
        %1257 = vmatprep.subr.mxu0 0.0
        %1258 = vmatpush1.msra.mxu0 0.0
        %1259 = vmatprep.mubr.f32.mxu0 0.0
        %1260 = vmatmul.mubr.f32.gmra.mrb[0].mxu0 %v1134
        %v1261 = vpop.f32.mrb[0].mxu0
        %v1262 = vadd.f32 %v1193, %v1261
        %v1263 = vpop.f32.mrb[0].mxu0
        %1264 = vmatprep.mubr.f32.mxu0 0.0
        %1265 = vmatmul.mubr.f32.gmra.mrb[0].mxu0 %v1135
        %v1266 = vpop.f32.mrb[0].mxu0
        %v1267 = vadd.f32 %v1193, %v1266
        %v1268 = vpop.f32.mrb[0].mxu0
        %1269 = vmatprep.mubr.f32.mxu0 0.0
        %1270 = vmatmul.mubr.f32.gmra.mrb[0].mxu0 %v1136
        %v1271 = vpop.f32.mrb[0].mxu0
        %v1272 = vadd.f32 %v1193, %v1271
        %v1273 = vpop.f32.mrb[0].mxu0
        %1274 = vmatprep.mubr.f32.mxu0 0.0
        %1275 = vmatmul.mubr.f32.gmra.mrb[0].mxu0 %v1137
        %v1276 = vpop.f32.mrb[0].mxu0
        %v1277 = vadd.f32 %v1193, %v1276
        %v1278 = vpop.f32.mrb[0].mxu0
        %1279 = vmatprep.mubr.f32.mxu0 0.0
        %1280 = vmatmul.mubr.f32.gmra.mrb[0].mxu0 %v1138
        %v1281 = vpop.f32.mrb[0].mxu0
        %v1282 = vadd.f32 %v1193, %v1281
        %v1283 = vpop.f32.mrb[0].mxu0
        %1284 = vmatprep.mubr.f32.mxu0 0.0
        %1285 = vmatmul.mubr.f32.gmra.mrb[0].mxu0 %v1139
        %v1286 = vpop.f32.mrb[0].mxu0
        %v1287 = vadd.f32 %v1193, %v1286
        %v1288 = vpop.f32.mrb[0].mxu0
        %1289 = vmatprep.mubr.f32.mxu0 0.0
        %1290 = vmatmul.mubr.f32.gmra.mrb[0].mxu0 %v1140
        %v1291 = vpop.f32.mrb[0].mxu0
        %v1292 = vadd.f32 %v1193, %v1291
        %v1293 = vpop.f32.mrb[0].mxu0
        %1294 = vmatprep.mubr.f32.mxu0 0.0
        %1295 = vmatmul.mubr.f32.gmra.mrb[0].mxu0 %v1141
        %v1296 = vpop.f32.mrb[0].mxu0
        %v1297 = vadd.f32 %v1193, %v1296
        %v1298 = vpop.f32.mrb[0].mxu0
        %1299 = vmatprep.mubr.f32.mxu0 0.0
        %1300 = vmatmul.mubr.f32.gmra.mrb[0].mxu0 %v1142
        %v1301 = vpop.f32.mrb[0].mxu0
        %v1302 = vadd.f32 %v1193, %v1301
        %v1303 = vpop.f32.mrb[0].mxu0
        %1304 = vmatprep.mubr.f32.mxu0 0.0
        %1305 = vmatmul.mubr.f32.gmra.mrb[0].mxu0 %v1143
        %v1306 = vpop.f32.mrb[0].mxu0
        %v1307 = vadd.f32 %v1193, %v1306
        %v1308 = vpop.f32.mrb[0].mxu0
        %1309 = vmatprep.mubr.f32.mxu0 0.0
        %1310 = vmatmul.mubr.f32.gmra.mrb[0].mxu0 %v1144
        %v1311 = vpop.f32.mrb[0].mxu0
        %v1312 = vadd.f32 %v1193, %v1311
        %v1313 = vpop.f32.mrb[0].mxu0
        %1314 = vmatprep.mubr.f32.mxu0 0.0
        %1315 = vmatmul.mubr.f32.gmra.mrb[0].mxu0 %v1145
        %v1316 = vpop.f32.mrb[0].mxu0
        %v1317 = vadd.f32 %v1193, %v1316
        %v1318 = vpop.f32.mrb[0].mxu0
        %1319 = vmatprep.mubr.f32.mxu0 0.0
        %1320 = vmatmul.mubr.f32.gmra.mrb[0].mxu0 %v1146
        %v1321 = vpop.f32.mrb[0].mxu0
        %v1322 = vadd.f32 %v1193, %v1321
        %v1323 = vpop.f32.mrb[0].mxu0
        %1324 = vmatprep.mubr.f32.mxu0 0.0
        %1325 = vmatmul.mubr.f32.gmra.mrb[0].mxu0 %v1147
        %v1326 = vpop.f32.mrb[0].mxu0
        %v1327 = vadd.f32 %v1193, %v1326
        %v1328 = vpop.f32.mrb[0].mxu0
        %1329 = vmatprep.mubr.f32.mxu0 0.0
        %1330 = vmatmul.mubr.f32.gmra.mrb[0].mxu0 %v1148
        %v1331 = vpop.f32.mrb[0].mxu0
        %v1332 = vadd.f32 %v1193, %v1331
        %v1333 = vpop.f32.mrb[0].mxu0
        %1334 = vmatprep.mubr.f32.mxu0 0.0
        %1335 = vmatmul.mubr.f32.gmra.mrb[0].mxu0 %v1149
        %v1336 = vpop.f32.mrb[0].mxu0
        %v1337 = vadd.f32 %v1193, %v1336
        %v1338 = vpop.f32.mrb[0].mxu0
        %1339 = vmatprep.mubr.f32.mxu0 0.0
        %1340 = vmatmul.mubr.f32.gmra.mrb[0].mxu0 %v1150
        %v1341 = vpop.f32.mrb[0].mxu0
        %v1342 = vadd.f32 %v1193, %v1341
        %v1343 = vpop.f32.mrb[0].mxu0
        %1344 = vmatprep.mubr.f32.mxu0 0.0
        %1345 = vmatmul.mubr.f32.gmra.mrb[0].mxu0 %v1151
        %v1346 = vpop.f32.mrb[0].mxu0
        %v1347 = vadd.f32 %v1193, %v1346
        %v1348 = vpop.f32.mrb[0].mxu0
        %1349 = vmatprep.mubr.f32.mxu0 0.0
        %1350 = vmatmul.mubr.f32.gmra.mrb[0].mxu0 %v1152
        %v1351 = vpop.f32.mrb[0].mxu0
        %v1352 = vadd.f32 %v1193, %v1351
        %v1353 = vpop.f32.mrb[0].mxu0
        %1354 = vdwg.mxu0
        %v1355 = vmax.f32 %v1262, 0.0
        %v1356 = vmax.f32 %v1267, 0.0
        %v1357 = vmax.f32 %v1272, 0.0
        %v1358 = vmax.f32 %v1277, 0.0
        %v1359 = vmax.f32 %v1282, 0.0
        %v1360 = vmax.f32 %v1287, 0.0
        %v1361 = vmax.f32 %v1292, 0.0
        %v1362 = vmax.f32 %v1297, 0.0
        %v1363 = vmax.f32 %v1302, 0.0
        %v1364 = vmax.f32 %v1307, 0.0
        %v1365 = vmax.f32 %v1312, 0.0
        %v1366 = vmax.f32 %v1317, 0.0
        %v1367 = vmax.f32 %v1322, 0.0
        %v1368 = vmax.f32 %v1327, 0.0
        %v1369 = vmax.f32 %v1332, 0.0
        %v1370 = vmax.f32 %v1337, 0.0
        %v1371 = vmax.f32 %v1342, 0.0
        %v1372 = vmax.f32 %v1347, 0.0
        %v1373 = vmax.f32 %v1352, 0.0
        %1374 = vst [vmem:[%s672] sm:$0xff] %v1355
        %1375 = vst [vmem:[%s672 + $0x8] sm:$0xff] %v1356
        %1376 = vst [vmem:[%s672 + $0x10] sm:$0xff] %v1357
        %1377 = vst [vmem:[%s672 + $0x18] sm:$0xff] %v1358
        %1378 = vst [vmem:[%s672 + $0x20] sm:$0xff] %v1359
        %1379 = vst [vmem:[%s672 + $0x28] sm:$0xff] %v1360
        %1380 = vst [vmem:[%s672 + $0x30] sm:$0xff] %v1361
        %1381 = vst [vmem:[%s672 + $0x38] sm:$0xff] %v1362
        %1382 = vst [vmem:[%s672 + $0x40] sm:$0xff] %v1363
        %1383 = vst [vmem:[%s672 + $0x48] sm:$0xff] %v1364
        %1384 = vst [vmem:[%s672 + $0x50] sm:$0xff] %v1365
        %1385 = vst [vmem:[%s672 + $0x58] sm:$0xff] %v1366
        %1386 = vst [vmem:[%s672 + $0x60] sm:$0xff] %v1367
        %1387 = vst [vmem:[%s672 + $0x68] sm:$0xff] %v1368
        %1388 = vst [vmem:[%s672 + $0x70] sm:$0xff] %v1369
        %1389 = vst [vmem:[%s672 + $0x78] sm:$0xff] %v1370
        %1390 = vst [vmem:[%s672 + $0x80] sm:$0xff] %v1371
        %1391 = vst [vmem:[%s672 + $0x88] sm:$0xff] %v1372
        %1392 = vst [vmem:[%s672 + $0x90] sm:$0xff] %v1373
        %v1393 = vld [vmem:[%s7] sm:$0xff]
        %v1394 = vld [vmem:[%s7 + $0x8] sm:$0xff]
        %v1395 = vld [vmem:[%s7 + $0x10] sm:$0xff]
        %v1396 = vld [vmem:[%s7 + $0x18] sm:$0xff]
        %v1397 = vld [vmem:[%s7 + $0x20] sm:$0xff]
        %v1398 = vld [vmem:[%s7 + $0x28] sm:$0xff]
        %v1399 = vld [vmem:[%s7 + $0x30] sm:$0xff]
        %v1400 = vld [vmem:[%s7 + $0x38] sm:$0xff]
        %v1401 = vld [vmem:[%s7 + $0x40] sm:$0xff]
        %v1402 = vld [vmem:[%s7 + $0x48] sm:$0xff]
        %v1403 = vld [vmem:[%s7 + $0x50] sm:$0xff]
        %v1404 = vld [vmem:[%s7 + $0x58] sm:$0xff]
        %v1405 = vld [vmem:[%s7 + $0x60] sm:$0xff]
        %v1406 = vld [vmem:[%s7 + $0x68] sm:$0xff]
        %v1407 = vld [vmem:[%s7 + $0x70] sm:$0xff]
        %v1408 = vld [vmem:[%s7 + $0x78] sm:$0xff]
        %v1409 = vld [vmem:[%s8] sm:$0x1]
        %v1411 = vlaneseq
        %v1412 = vshrl.u32 %v1411, 7
        %v1413 = vsub.s32 0, %v1412
        %v1414 = vrot.slane %v1409, %v1413
        %1416 = vmatprep.subr.mxu0 0.0
        %1417 = vmatpush1.msra.mxu0 %v1393
        %1418 = vmatprep.subr.mxu0 0.0
        %1419 = vmatpush1.msra.mxu0 %v1394
        %1420 = vmatprep.subr.mxu0 0.0
        %1421 = vmatpush1.msra.mxu0 %v1395
        %1422 = vmatprep.subr.mxu0 0.0
        %1423 = vmatpush1.msra.mxu0 %v1396
        %1424 = vmatprep.subr.mxu0 0.0
        %1425 = vmatpush1.msra.mxu0 %v1397
        %1426 = vmatprep.subr.mxu0 0.0
        %1427 = vmatpush1.msra.mxu0 %v1398
        %1428 = vmatprep.subr.mxu0 0.0
        %1429 = vmatpush1.msra.mxu0 %v1399
        %1430 = vmatprep.subr.mxu0 0.0
        %1431 = vmatpush1.msra.mxu0 %v1400
        %1432 = vmatprep.subr.mxu0 0.0
        %1433 = vmatpush1.msra.mxu0 %v1401
        %1434 = vmatprep.subr.mxu0 0.0
        %1435 = vmatpush1.msra.mxu0 %v1402
        %1436 = vmatprep.subr.mxu0 0.0
        %1437 = vmatpush1.msra.mxu0 %v1403
        %1438 = vmatprep.subr.mxu0 0.0
        %1439 = vmatpush1.msra.mxu0 %v1404
        %1440 = vmatprep.subr.mxu0 0.0
        %1441 = vmatpush1.msra.mxu0 %v1405
        %1442 = vmatprep.subr.mxu0 0.0
        %1443 = vmatpush1.msra.mxu0 %v1406
        %1444 = vmatprep.subr.mxu0 0.0
        %1445 = vmatpush1.msra.mxu0 %v1407
        %1446 = vmatprep.subr.mxu0 0.0
        %1447 = vmatpush1.msra.mxu0 %v1408
        %1448 = vmatprep.subr.mxu0 0.0
        %1449 = vmatpush1.msra.mxu0 0.0
        %1450 = vmatprep.subr.mxu0 0.0
        %1451 = vmatpush1.msra.mxu0 0.0
        %1452 = vmatprep.subr.mxu0 0.0
        %1453 = vmatpush1.msra.mxu0 0.0
        %1454 = vmatprep.subr.mxu0 0.0
        %1455 = vmatpush1.msra.mxu0 0.0
        %1456 = vmatprep.subr.mxu0 0.0
        %1457 = vmatpush1.msra.mxu0 0.0
        %1458 = vmatprep.subr.mxu0 0.0
        %1459 = vmatpush1.msra.mxu0 0.0
        %1460 = vmatprep.subr.mxu0 0.0
        %1461 = vmatpush1.msra.mxu0 0.0
        %1462 = vmatprep.subr.mxu0 0.0
        %1463 = vmatpush1.msra.mxu0 0.0
        %1464 = vmatprep.subr.mxu0 0.0
        %1465 = vmatpush1.msra.mxu0 0.0
        %1466 = vmatprep.subr.mxu0 0.0
        %1467 = vmatpush1.msra.mxu0 0.0
        %1468 = vmatprep.subr.mxu0 0.0
        %1469 = vmatpush1.msra.mxu0 0.0
        %1470 = vmatprep.subr.mxu0 0.0
        %1471 = vmatpush1.msra.mxu0 0.0
        %1472 = vmatprep.subr.mxu0 0.0
        %1473 = vmatpush1.msra.mxu0 0.0
        %1474 = vmatprep.subr.mxu0 0.0
        %1475 = vmatpush1.msra.mxu0 0.0
        %1476 = vmatprep.subr.mxu0 0.0
        %1477 = vmatpush1.msra.mxu0 0.0
        %1478 = vmatprep.subr.mxu0 0.0
        %1479 = vmatpush1.msra.mxu0 0.0
        %1480 = vmatprep.mubr.f32.mxu0 0.0
        %1481 = vmatmul.mubr.f32.gmra.mrb[0].mxu0 %v1355
        %v1482 = vpop.f32.mrb[0].mxu0
        %v1483 = vadd.f32 %v1414, %v1482
        %v1484 = vpop.f32.mrb[0].mxu0
        %1485 = vmatprep.mubr.f32.mxu0 0.0
        %1486 = vmatmul.mubr.f32.gmra.mrb[0].mxu0 %v1356
        %v1487 = vpop.f32.mrb[0].mxu0
        %v1488 = vadd.f32 %v1414, %v1487
        %v1489 = vpop.f32.mrb[0].mxu0
        %1490 = vmatprep.mubr.f32.mxu0 0.0
        %1491 = vmatmul.mubr.f32.gmra.mrb[0].mxu0 %v1357
        %v1492 = vpop.f32.mrb[0].mxu0
        %v1493 = vadd.f32 %v1414, %v1492
        %v1494 = vpop.f32.mrb[0].mxu0
        %1495 = vmatprep.mubr.f32.mxu0 0.0
        %1496 = vmatmul.mubr.f32.gmra.mrb[0].mxu0 %v1358
        %v1497 = vpop.f32.mrb[0].mxu0
        %v1498 = vadd.f32 %v1414, %v1497
        %v1499 = vpop.f32.mrb[0].mxu0
        %1500 = vmatprep.mubr.f32.mxu0 0.0
        %1501 = vmatmul.mubr.f32.gmra.mrb[0].mxu0 %v1359
        %v1502 = vpop.f32.mrb[0].mxu0
        %v1503 = vadd.f32 %v1414, %v1502
        %v1504 = vpop.f32.mrb[0].mxu0
        %1505 = vmatprep.mubr.f32.mxu0 0.0
        %1506 = vmatmul.mubr.f32.gmra.mrb[0].mxu0 %v1360
        %v1507 = vpop.f32.mrb[0].mxu0
        %v1508 = vadd.f32 %v1414, %v1507
        %v1509 = vpop.f32.mrb[0].mxu0
        %1510 = vmatprep.mubr.f32.mxu0 0.0
        %1511 = vmatmul.mubr.f32.gmra.mrb[0].mxu0 %v1361
        %v1512 = vpop.f32.mrb[0].mxu0
        %v1513 = vadd.f32 %v1414, %v1512
        %v1514 = vpop.f32.mrb[0].mxu0
        %1515 = vmatprep.mubr.f32.mxu0 0.0
        %1516 = vmatmul.mubr.f32.gmra.mrb[0].mxu0 %v1362
        %v1517 = vpop.f32.mrb[0].mxu0
        %v1518 = vadd.f32 %v1414, %v1517
        %v1519 = vpop.f32.mrb[0].mxu0
        %1520 = vmatprep.mubr.f32.mxu0 0.0
        %1521 = vmatmul.mubr.f32.gmra.mrb[0].mxu0 %v1363
        %v1522 = vpop.f32.mrb[0].mxu0
        %v1523 = vadd.f32 %v1414, %v1522
        %v1524 = vpop.f32.mrb[0].mxu0
        %1525 = vmatprep.mubr.f32.mxu0 0.0
        %1526 = vmatmul.mubr.f32.gmra.mrb[0].mxu0 %v1364
        %v1527 = vpop.f32.mrb[0].mxu0
        %v1528 = vadd.f32 %v1414, %v1527
        %v1529 = vpop.f32.mrb[0].mxu0
        %1530 = vmatprep.mubr.f32.mxu0 0.0
        %1531 = vmatmul.mubr.f32.gmra.mrb[0].mxu0 %v1365
        %v1532 = vpop.f32.mrb[0].mxu0
        %v1533 = vadd.f32 %v1414, %v1532
        %v1534 = vpop.f32.mrb[0].mxu0
        %1535 = vmatprep.mubr.f32.mxu0 0.0
        %1536 = vmatmul.mubr.f32.gmra.mrb[0].mxu0 %v1366
        %v1537 = vpop.f32.mrb[0].mxu0
        %v1538 = vadd.f32 %v1414, %v1537
        %v1539 = vpop.f32.mrb[0].mxu0
        %1540 = vmatprep.mubr.f32.mxu0 0.0
        %1541 = vmatmul.mubr.f32.gmra.mrb[0].mxu0 %v1367
        %v1542 = vpop.f32.mrb[0].mxu0
        %v1543 = vadd.f32 %v1414, %v1542
        %v1544 = vpop.f32.mrb[0].mxu0
        %1545 = vmatprep.mubr.f32.mxu0 0.0
        %1546 = vmatmul.mubr.f32.gmra.mrb[0].mxu0 %v1368
        %v1547 = vpop.f32.mrb[0].mxu0
        %v1548 = vadd.f32 %v1414, %v1547
        %v1549 = vpop.f32.mrb[0].mxu0
        %1550 = vmatprep.mubr.f32.mxu0 0.0
        %1551 = vmatmul.mubr.f32.gmra.mrb[0].mxu0 %v1369
        %v1552 = vpop.f32.mrb[0].mxu0
        %v1553 = vadd.f32 %v1414, %v1552
        %v1554 = vpop.f32.mrb[0].mxu0
        %1555 = vmatprep.mubr.f32.mxu0 0.0
        %1556 = vmatmul.mubr.f32.gmra.mrb[0].mxu0 %v1370
        %v1557 = vpop.f32.mrb[0].mxu0
        %v1558 = vadd.f32 %v1414, %v1557
        %v1559 = vpop.f32.mrb[0].mxu0
        %1560 = vmatprep.mubr.f32.mxu0 0.0
        %1561 = vmatmul.mubr.f32.gmra.mrb[0].mxu0 %v1371
        %v1562 = vpop.f32.mrb[0].mxu0
        %v1563 = vadd.f32 %v1414, %v1562
        %v1564 = vpop.f32.mrb[0].mxu0
        %1565 = vmatprep.mubr.f32.mxu0 0.0
        %1566 = vmatmul.mubr.f32.gmra.mrb[0].mxu0 %v1372
        %v1567 = vpop.f32.mrb[0].mxu0
        %v1568 = vadd.f32 %v1414, %v1567
        %v1569 = vpop.f32.mrb[0].mxu0
        %1570 = vmatprep.mubr.f32.mxu0 0.0
        %1571 = vmatmul.mubr.f32.gmra.mrb[0].mxu0 %v1373
        %v1572 = vpop.f32.mrb[0].mxu0
        %v1573 = vadd.f32 %v1414, %v1572
        %v1574 = vpop.f32.mrb[0].mxu0
        %1575 = vdwg.mxu0
        %1576 = vst [vmem:[%s709] sm:$0xff] %v1483
        %1577 = vst [vmem:[%s709 + $0x8] sm:$0xff] %v1488
        %1578 = vst [vmem:[%s709 + $0x10] sm:$0xff] %v1493
        %1579 = vst [vmem:[%s709 + $0x18] sm:$0xff] %v1498
        %1580 = vst [vmem:[%s709 + $0x20] sm:$0xff] %v1503
        %1581 = vst [vmem:[%s709 + $0x28] sm:$0xff] %v1508
        %1582 = vst [vmem:[%s709 + $0x30] sm:$0xff] %v1513
        %1583 = vst [vmem:[%s709 + $0x38] sm:$0xff] %v1518
        %1584 = vst [vmem:[%s709 + $0x40] sm:$0xff] %v1523
        %1585 = vst [vmem:[%s709 + $0x48] sm:$0xff] %v1528
        %1586 = vst [vmem:[%s709 + $0x50] sm:$0xff] %v1533
        %1587 = vst [vmem:[%s709 + $0x58] sm:$0xff] %v1538
        %1588 = vst [vmem:[%s709 + $0x60] sm:$0xff] %v1543
        %1589 = vst [vmem:[%s709 + $0x68] sm:$0xff] %v1548
        %1590 = vst [vmem:[%s709 + $0x70] sm:$0xff] %v1553
        %1591 = vst [vmem:[%s709 + $0x78] sm:$0xff] %v1558
        %1592 = vst [vmem:[%s709 + $0x80] sm:$0xff] %v1563
        %1593 = vst [vmem:[%s709 + $0x88] sm:$0xff] %v1568
        %1594 = vst [vmem:[%s709 + $0x90] sm:$0xff] %v1573
        %v1595 = vld [vmem:[%s9] sm:$0xff]
        %v1596 = vld [vmem:[%s9 + $0x8] sm:$0xff]
        %v1597 = vld [vmem:[%s9 + $0x10] sm:$0xff]
        %v1598 = vld [vmem:[%s9 + $0x18] sm:$0xff]
        %v1599 = vld [vmem:[%s9 + $0x20] sm:$0xff]
        %v1600 = vld [vmem:[%s9 + $0x28] sm:$0xff]
        %v1601 = vld [vmem:[%s9 + $0x30] sm:$0xff]
        %v1602 = vld [vmem:[%s9 + $0x38] sm:$0xff]
        %v1603 = vld [vmem:[%s9 + $0x40] sm:$0xff]
        %v1604 = vld [vmem:[%s9 + $0x48] sm:$0xff]
        %v1605 = vld [vmem:[%s9 + $0x50] sm:$0xff]
        %v1606 = vld [vmem:[%s9 + $0x58] sm:$0xff]
        %v1607 = vld [vmem:[%s9 + $0x60] sm:$0xff]
        %v1608 = vld [vmem:[%s9 + $0x68] sm:$0xff]
        %v1609 = vld [vmem:[%s9 + $0x70] sm:$0xff]
        %v1610 = vld [vmem:[%s9 + $0x78] sm:$0xff]
        %v1611 = vld [vmem:[%s10] sm:$0x1]
        %v1613 = vlaneseq
        %v1614 = vshrl.u32 %v1613, 7
        %v1615 = vsub.s32 0, %v1614
        %v1616 = vrot.slane %v1611, %v1615
        %1618 = vmatprep.subr.mxu0 0.0
        %1619 = vmatpush1.msra.mxu0 %v1595
        %1620 = vmatprep.subr.mxu0 0.0
        %1621 = vmatpush1.msra.mxu0 %v1596
        %1622 = vmatprep.subr.mxu0 0.0
        %1623 = vmatpush1.msra.mxu0 %v1597
        %1624 = vmatprep.subr.mxu0 0.0
        %1625 = vmatpush1.msra.mxu0 %v1598
        %1626 = vmatprep.subr.mxu0 0.0
        %1627 = vmatpush1.msra.mxu0 %v1599
        %1628 = vmatprep.subr.mxu0 0.0
        %1629 = vmatpush1.msra.mxu0 %v1600
        %1630 = vmatprep.subr.mxu0 0.0
        %1631 = vmatpush1.msra.mxu0 %v1601
        %1632 = vmatprep.subr.mxu0 0.0
        %1633 = vmatpush1.msra.mxu0 %v1602
        %1634 = vmatprep.subr.mxu0 0.0
        %1635 = vmatpush1.msra.mxu0 %v1603
        %1636 = vmatprep.subr.mxu0 0.0
        %1637 = vmatpush1.msra.mxu0 %v1604
        %1638 = vmatprep.subr.mxu0 0.0
        %1639 = vmatpush1.msra.mxu0 %v1605
        %1640 = vmatprep.subr.mxu0 0.0
        %1641 = vmatpush1.msra.mxu0 %v1606
        %1642 = vmatprep.subr.mxu0 0.0
        %1643 = vmatpush1.msra.mxu0 %v1607
        %1644 = vmatprep.subr.mxu0 0.0
        %1645 = vmatpush1.msra.mxu0 %v1608
        %1646 = vmatprep.subr.mxu0 0.0
        %1647 = vmatpush1.msra.mxu0 %v1609
        %1648 = vmatprep.subr.mxu0 0.0
        %1649 = vmatpush1.msra.mxu0 %v1610
        %1650 = vmatprep.subr.mxu0 0.0
        %1651 = vmatpush1.msra.mxu0 0.0
        %1652 = vmatprep.subr.mxu0 0.0
        %1653 = vmatpush1.msra.mxu0 0.0
        %1654 = vmatprep.subr.mxu0 0.0
        %1655 = vmatpush1.msra.mxu0 0.0
        %1656 = vmatprep.subr.mxu0 0.0
        %1657 = vmatpush1.msra.mxu0 0.0
        %1658 = vmatprep.subr.mxu0 0.0
        %1659 = vmatpush1.msra.mxu0 0.0
        %1660 = vmatprep.subr.mxu0 0.0
        %1661 = vmatpush1.msra.mxu0 0.0
        %1662 = vmatprep.subr.mxu0 0.0
        %1663 = vmatpush1.msra.mxu0 0.0
        %1664 = vmatprep.subr.mxu0 0.0
        %1665 = vmatpush1.msra.mxu0 0.0
        %1666 = vmatprep.subr.mxu0 0.0
        %1667 = vmatpush1.msra.mxu0 0.0
        %1668 = vmatprep.subr.mxu0 0.0
        %1669 = vmatpush1.msra.mxu0 0.0
        %1670 = vmatprep.subr.mxu0 0.0
        %1671 = vmatpush1.msra.mxu0 0.0
        %1672 = vmatprep.subr.mxu0 0.0
        %1673 = vmatpush1.msra.mxu0 0.0
        %1674 = vmatprep.subr.mxu0 0.0
        %1675 = vmatpush1.msra.mxu0 0.0
        %1676 = vmatprep.subr.mxu0 0.0
        %1677 = vmatpush1.msra.mxu0 0.0
        %1678 = vmatprep.subr.mxu0 0.0
        %1679 = vmatpush1.msra.mxu0 0.0
        %1680 = vmatprep.subr.mxu0 0.0
        %1681 = vmatpush1.msra.mxu0 0.0
        %1682 = vmatprep.mubr.f32.mxu0 0.0
        %1683 = vmatmul.mubr.f32.gmra.mrb[0].mxu0 %v1483
        %v1684 = vpop.f32.mrb[0].mxu0
        %v1685 = vadd.f32 %v1616, %v1684
        %v1686 = vpop.f32.mrb[0].mxu0
        %1687 = vmatprep.mubr.f32.mxu0 0.0
        %1688 = vmatmul.mubr.f32.gmra.mrb[0].mxu0 %v1488
        %v1689 = vpop.f32.mrb[0].mxu0
        %v1690 = vadd.f32 %v1616, %v1689
        %v1691 = vpop.f32.mrb[0].mxu0
        %1692 = vmatprep.mubr.f32.mxu0 0.0
        %1693 = vmatmul.mubr.f32.gmra.mrb[0].mxu0 %v1493
        %v1694 = vpop.f32.mrb[0].mxu0
        %v1695 = vadd.f32 %v1616, %v1694
        %v1696 = vpop.f32.mrb[0].mxu0
        %1697 = vmatprep.mubr.f32.mxu0 0.0
        %1698 = vmatmul.mubr.f32.gmra.mrb[0].mxu0 %v1498
        %v1699 = vpop.f32.mrb[0].mxu0
        %v1700 = vadd.f32 %v1616, %v1699
        %v1701 = vpop.f32.mrb[0].mxu0
        %1702 = vmatprep.mubr.f32.mxu0 0.0
        %1703 = vmatmul.mubr.f32.gmra.mrb[0].mxu0 %v1503
        %v1704 = vpop.f32.mrb[0].mxu0
        %v1705 = vadd.f32 %v1616, %v1704
        %v1706 = vpop.f32.mrb[0].mxu0
        %1707 = vmatprep.mubr.f32.mxu0 0.0
        %1708 = vmatmul.mubr.f32.gmra.mrb[0].mxu0 %v1508
        %v1709 = vpop.f32.mrb[0].mxu0
        %v1710 = vadd.f32 %v1616, %v1709
        %v1711 = vpop.f32.mrb[0].mxu0
        %1712 = vmatprep.mubr.f32.mxu0 0.0
        %1713 = vmatmul.mubr.f32.gmra.mrb[0].mxu0 %v1513
        %v1714 = vpop.f32.mrb[0].mxu0
        %v1715 = vadd.f32 %v1616, %v1714
        %v1716 = vpop.f32.mrb[0].mxu0
        %1717 = vmatprep.mubr.f32.mxu0 0.0
        %1718 = vmatmul.mubr.f32.gmra.mrb[0].mxu0 %v1518
        %v1719 = vpop.f32.mrb[0].mxu0
        %v1720 = vadd.f32 %v1616, %v1719
        %v1721 = vpop.f32.mrb[0].mxu0
        %1722 = vmatprep.mubr.f32.mxu0 0.0
        %1723 = vmatmul.mubr.f32.gmra.mrb[0].mxu0 %v1523
        %v1724 = vpop.f32.mrb[0].mxu0
        %v1725 = vadd.f32 %v1616, %v1724
        %v1726 = vpop.f32.mrb[0].mxu0
        %1727 = vmatprep.mubr.f32.mxu0 0.0
        %1728 = vmatmul.mubr.f32.gmra.mrb[0].mxu0 %v1528
        %v1729 = vpop.f32.mrb[0].mxu0
        %v1730 = vadd.f32 %v1616, %v1729
        %v1731 = vpop.f32.mrb[0].mxu0
        %1732 = vmatprep.mubr.f32.mxu0 0.0
        %1733 = vmatmul.mubr.f32.gmra.mrb[0].mxu0 %v1533
        %v1734 = vpop.f32.mrb[0].mxu0
        %v1735 = vadd.f32 %v1616, %v1734
        %v1736 = vpop.f32.mrb[0].mxu0
        %1737 = vmatprep.mubr.f32.mxu0 0.0
        %1738 = vmatmul.mubr.f32.gmra.mrb[0].mxu0 %v1538
        %v1739 = vpop.f32.mrb[0].mxu0
        %v1740 = vadd.f32 %v1616, %v1739
        %v1741 = vpop.f32.mrb[0].mxu0
        %1742 = vmatprep.mubr.f32.mxu0 0.0
        %1743 = vmatmul.mubr.f32.gmra.mrb[0].mxu0 %v1543
        %v1744 = vpop.f32.mrb[0].mxu0
        %v1745 = vadd.f32 %v1616, %v1744
        %v1746 = vpop.f32.mrb[0].mxu0
        %1747 = vmatprep.mubr.f32.mxu0 0.0
        %1748 = vmatmul.mubr.f32.gmra.mrb[0].mxu0 %v1548
        %v1749 = vpop.f32.mrb[0].mxu0
        %v1750 = vadd.f32 %v1616, %v1749
        %v1751 = vpop.f32.mrb[0].mxu0
        %1752 = vmatprep.mubr.f32.mxu0 0.0
        %1753 = vmatmul.mubr.f32.gmra.mrb[0].mxu0 %v1553
        %v1754 = vpop.f32.mrb[0].mxu0
        %v1755 = vadd.f32 %v1616, %v1754
        %v1756 = vpop.f32.mrb[0].mxu0
        %1757 = vmatprep.mubr.f32.mxu0 0.0
        %1758 = vmatmul.mubr.f32.gmra.mrb[0].mxu0 %v1558
        %v1759 = vpop.f32.mrb[0].mxu0
        %v1760 = vadd.f32 %v1616, %v1759
        %v1761 = vpop.f32.mrb[0].mxu0
        %1762 = vmatprep.mubr.f32.mxu0 0.0
        %1763 = vmatmul.mubr.f32.gmra.mrb[0].mxu0 %v1563
        %v1764 = vpop.f32.mrb[0].mxu0
        %v1765 = vadd.f32 %v1616, %v1764
        %v1766 = vpop.f32.mrb[0].mxu0
        %1767 = vmatprep.mubr.f32.mxu0 0.0
        %1768 = vmatmul.mubr.f32.gmra.mrb[0].mxu0 %v1568
        %v1769 = vpop.f32.mrb[0].mxu0
        %v1770 = vadd.f32 %v1616, %v1769
        %v1771 = vpop.f32.mrb[0].mxu0
        %1772 = vmatprep.mubr.f32.mxu0 0.0
        %1773 = vmatmul.mubr.f32.gmra.mrb[0].mxu0 %v1573
        %v1774 = vpop.f32.mrb[0].mxu0
        %v1775 = vadd.f32 %v1616, %v1774
        %v1776 = vpop.f32.mrb[0].mxu0
        %1777 = vdwg.mxu0
        %v1778 = vmax.f32 %v1685, 0.0
        %v1779 = vmax.f32 %v1690, 0.0
        %v1780 = vmax.f32 %v1695, 0.0
        %v1781 = vmax.f32 %v1700, 0.0
        %v1782 = vmax.f32 %v1705, 0.0
        %v1783 = vmax.f32 %v1710, 0.0
        %v1784 = vmax.f32 %v1715, 0.0
        %v1785 = vmax.f32 %v1720, 0.0
        %v1786 = vmax.f32 %v1725, 0.0
        %v1787 = vmax.f32 %v1730, 0.0
        %v1788 = vmax.f32 %v1735, 0.0
        %v1789 = vmax.f32 %v1740, 0.0
        %v1790 = vmax.f32 %v1745, 0.0
        %v1791 = vmax.f32 %v1750, 0.0
        %v1792 = vmax.f32 %v1755, 0.0
        %v1793 = vmax.f32 %v1760, 0.0
        %v1794 = vmax.f32 %v1765, 0.0
        %v1795 = vmax.f32 %v1770, 0.0
        %v1796 = vmax.f32 %v1775, 0.0
        %v1797 = vld [vmem:[%s11] sm:$0xff]
        %v1798 = vld [vmem:[%s11 + $0x8] sm:$0xff]
        %v1799 = vld [vmem:[%s11 + $0x10] sm:$0xff]
        %v1800 = vld [vmem:[%s11 + $0x18] sm:$0xff]
        %v1801 = vld [vmem:[%s11 + $0x20] sm:$0xff]
        %v1802 = vld [vmem:[%s11 + $0x28] sm:$0xff]
        %v1803 = vld [vmem:[%s11 + $0x30] sm:$0xff]
        %v1804 = vld [vmem:[%s11 + $0x38] sm:$0xff]
        %v1805 = vld [vmem:[%s11 + $0x40] sm:$0xff]
        %v1806 = vld [vmem:[%s11 + $0x48] sm:$0xff]
        %v1807 = vld [vmem:[%s11 + $0x50] sm:$0xff]
        %v1808 = vld [vmem:[%s11 + $0x58] sm:$0xff]
        %v1809 = vld [vmem:[%s11 + $0x60] sm:$0xff]
        %v1810 = vld [vmem:[%s11 + $0x68] sm:$0xff]
        %v1811 = vld [vmem:[%s11 + $0x70] sm:$0xff]
        %v1812 = vld [vmem:[%s11 + $0x78] sm:$0xff]
        %v1813 = vld [vmem:[%s12] sm:$0x1]
        %v1815 = vlaneseq
        %v1816 = vshrl.u32 %v1815, 7
        %v1817 = vsub.s32 0, %v1816
        %v1818 = vrot.slane %v1813, %v1817
        %1820 = vmatprep.subr.mxu0 0.0
        %1821 = vmatpush1.msra.mxu0 %v1797
        %1822 = vmatprep.subr.mxu0 0.0
        %1823 = vmatpush1.msra.mxu0 %v1798
        %1824 = vmatprep.subr.mxu0 0.0
        %1825 = vmatpush1.msra.mxu0 %v1799
        %1826 = vmatprep.subr.mxu0 0.0
        %1827 = vmatpush1.msra.mxu0 %v1800
        %1828 = vmatprep.subr.mxu0 0.0
        %1829 = vmatpush1.msra.mxu0 %v1801
        %1830 = vmatprep.subr.mxu0 0.0
        %1831 = vmatpush1.msra.mxu0 %v1802
        %1832 = vmatprep.subr.mxu0 0.0
        %1833 = vmatpush1.msra.mxu0 %v1803
        %1834 = vmatprep.subr.mxu0 0.0
        %1835 = vmatpush1.msra.mxu0 %v1804
        %1836 = vmatprep.subr.mxu0 0.0
        %1837 = vmatpush1.msra.mxu0 %v1805
        %1838 = vmatprep.subr.mxu0 0.0
        %1839 = vmatpush1.msra.mxu0 %v1806
        %1840 = vmatprep.subr.mxu0 0.0
        %1841 = vmatpush1.msra.mxu0 %v1807
        %1842 = vmatprep.subr.mxu0 0.0
        %1843 = vmatpush1.msra.mxu0 %v1808
        %1844 = vmatprep.subr.mxu0 0.0
        %1845 = vmatpush1.msra.mxu0 %v1809
        %1846 = vmatprep.subr.mxu0 0.0
        %1847 = vmatpush1.msra.mxu0 %v1810
        %1848 = vmatprep.subr.mxu0 0.0
        %1849 = vmatpush1.msra.mxu0 %v1811
        %1850 = vmatprep.subr.mxu0 0.0
        %1851 = vmatpush1.msra.mxu0 %v1812
        %1852 = vmatprep.subr.mxu0 0.0
        %1853 = vmatpush1.msra.mxu0 0.0
        %1854 = vmatprep.subr.mxu0 0.0
        %1855 = vmatpush1.msra.mxu0 0.0
        %1856 = vmatprep.subr.mxu0 0.0
        %1857 = vmatpush1.msra.mxu0 0.0
        %1858 = vmatprep.subr.mxu0 0.0
        %1859 = vmatpush1.msra.mxu0 0.0
        %1860 = vmatprep.subr.mxu0 0.0
        %1861 = vmatpush1.msra.mxu0 0.0
        %1862 = vmatprep.subr.mxu0 0.0
        %1863 = vmatpush1.msra.mxu0 0.0
        %1864 = vmatprep.subr.mxu0 0.0
        %1865 = vmatpush1.msra.mxu0 0.0
        %1866 = vmatprep.subr.mxu0 0.0
        %1867 = vmatpush1.msra.mxu0 0.0
        %1868 = vmatprep.subr.mxu0 0.0
        %1869 = vmatpush1.msra.mxu0 0.0
        %1870 = vmatprep.subr.mxu0 0.0
        %1871 = vmatpush1.msra.mxu0 0.0
        %1872 = vmatprep.subr.mxu0 0.0
        %1873 = vmatpush1.msra.mxu0 0.0
        %1874 = vmatprep.subr.mxu0 0.0
        %1875 = vmatpush1.msra.mxu0 0.0
        %1876 = vmatprep.subr.mxu0 0.0
        %1877 = vmatpush1.msra.mxu0 0.0
        %1878 = vmatprep.subr.mxu0 0.0
        %1879 = vmatpush1.msra.mxu0 0.0
        %1880 = vmatprep.subr.mxu0 0.0
        %1881 = vmatpush1.msra.mxu0 0.0
        %1882 = vmatprep.subr.mxu0 0.0
        %1883 = vmatpush1.msra.mxu0 0.0
        %1884 = vmatprep.mubr.f32.mxu0 0.0
        %1885 = vmatmul.mubr.f32.gmra.mrb[0].mxu0 %v1778
        %v1886 = vpop.f32.mrb[0].mxu0
        %v1887 = vadd.f32 %v1818, %v1886
        %v1888 = vpop.f32.mrb[0].mxu0
        %1889 = vmatprep.mubr.f32.mxu0 0.0
        %1890 = vmatmul.mubr.f32.gmra.mrb[0].mxu0 %v1779
        %v1891 = vpop.f32.mrb[0].mxu0
        %v1892 = vadd.f32 %v1818, %v1891
        %v1893 = vpop.f32.mrb[0].mxu0
        %1894 = vmatprep.mubr.f32.mxu0 0.0
        %1895 = vmatmul.mubr.f32.gmra.mrb[0].mxu0 %v1780
        %v1896 = vpop.f32.mrb[0].mxu0
        %v1897 = vadd.f32 %v1818, %v1896
        %v1898 = vpop.f32.mrb[0].mxu0
        %1899 = vmatprep.mubr.f32.mxu0 0.0
        %1900 = vmatmul.mubr.f32.gmra.mrb[0].mxu0 %v1781
        %v1901 = vpop.f32.mrb[0].mxu0
        %v1902 = vadd.f32 %v1818, %v1901
        %v1903 = vpop.f32.mrb[0].mxu0
        %1904 = vmatprep.mubr.f32.mxu0 0.0
        %1905 = vmatmul.mubr.f32.gmra.mrb[0].mxu0 %v1782
        %v1906 = vpop.f32.mrb[0].mxu0
        %v1907 = vadd.f32 %v1818, %v1906
        %v1908 = vpop.f32.mrb[0].mxu0
        %1909 = vmatprep.mubr.f32.mxu0 0.0
        %1910 = vmatmul.mubr.f32.gmra.mrb[0].mxu0 %v1783
        %v1911 = vpop.f32.mrb[0].mxu0
        %v1912 = vadd.f32 %v1818, %v1911
        %v1913 = vpop.f32.mrb[0].mxu0
        %1914 = vmatprep.mubr.f32.mxu0 0.0
        %1915 = vmatmul.mubr.f32.gmra.mrb[0].mxu0 %v1784
        %v1916 = vpop.f32.mrb[0].mxu0
        %v1917 = vadd.f32 %v1818, %v1916
        %v1918 = vpop.f32.mrb[0].mxu0
        %1919 = vmatprep.mubr.f32.mxu0 0.0
        %1920 = vmatmul.mubr.f32.gmra.mrb[0].mxu0 %v1785
        %v1921 = vpop.f32.mrb[0].mxu0
        %v1922 = vadd.f32 %v1818, %v1921
        %v1923 = vpop.f32.mrb[0].mxu0
        %1924 = vmatprep.mubr.f32.mxu0 0.0
        %1925 = vmatmul.mubr.f32.gmra.mrb[0].mxu0 %v1786
        %v1926 = vpop.f32.mrb[0].mxu0
        %v1927 = vadd.f32 %v1818, %v1926
        %v1928 = vpop.f32.mrb[0].mxu0
        %1929 = vmatprep.mubr.f32.mxu0 0.0
        %1930 = vmatmul.mubr.f32.gmra.mrb[0].mxu0 %v1787
        %v1931 = vpop.f32.mrb[0].mxu0
        %v1932 = vadd.f32 %v1818, %v1931
        %v1933 = vpop.f32.mrb[0].mxu0
        %1934 = vmatprep.mubr.f32.mxu0 0.0
        %1935 = vmatmul.mubr.f32.gmra.mrb[0].mxu0 %v1788
        %v1936 = vpop.f32.mrb[0].mxu0
        %v1937 = vadd.f32 %v1818, %v1936
        %v1938 = vpop.f32.mrb[0].mxu0
        %1939 = vmatprep.mubr.f32.mxu0 0.0
        %1940 = vmatmul.mubr.f32.gmra.mrb[0].mxu0 %v1789
        %v1941 = vpop.f32.mrb[0].mxu0
        %v1942 = vadd.f32 %v1818, %v1941
        %v1943 = vpop.f32.mrb[0].mxu0
        %1944 = vmatprep.mubr.f32.mxu0 0.0
        %1945 = vmatmul.mubr.f32.gmra.mrb[0].mxu0 %v1790
        %v1946 = vpop.f32.mrb[0].mxu0
        %v1947 = vadd.f32 %v1818, %v1946
        %v1948 = vpop.f32.mrb[0].mxu0
        %1949 = vmatprep.mubr.f32.mxu0 0.0
        %1950 = vmatmul.mubr.f32.gmra.mrb[0].mxu0 %v1791
        %v1951 = vpop.f32.mrb[0].mxu0
        %v1952 = vadd.f32 %v1818, %v1951
        %v1953 = vpop.f32.mrb[0].mxu0
        %1954 = vmatprep.mubr.f32.mxu0 0.0
        %1955 = vmatmul.mubr.f32.gmra.mrb[0].mxu0 %v1792
        %v1956 = vpop.f32.mrb[0].mxu0
        %v1957 = vadd.f32 %v1818, %v1956
        %v1958 = vpop.f32.mrb[0].mxu0
        %1959 = vmatprep.mubr.f32.mxu0 0.0
        %1960 = vmatmul.mubr.f32.gmra.mrb[0].mxu0 %v1793
        %v1961 = vpop.f32.mrb[0].mxu0
        %v1962 = vadd.f32 %v1818, %v1961
        %v1963 = vpop.f32.mrb[0].mxu0
        %1964 = vmatprep.mubr.f32.mxu0 0.0
        %1965 = vmatmul.mubr.f32.gmra.mrb[0].mxu0 %v1794
        %v1966 = vpop.f32.mrb[0].mxu0
        %v1967 = vadd.f32 %v1818, %v1966
        %v1968 = vpop.f32.mrb[0].mxu0
        %1969 = vmatprep.mubr.f32.mxu0 0.0
        %1970 = vmatmul.mubr.f32.gmra.mrb[0].mxu0 %v1795
        %v1971 = vpop.f32.mrb[0].mxu0
        %v1972 = vadd.f32 %v1818, %v1971
        %v1973 = vpop.f32.mrb[0].mxu0
        %1974 = vmatprep.mubr.f32.mxu0 0.0
        %1975 = vmatmul.mubr.f32.gmra.mrb[0].mxu0 %v1796
        %v1976 = vpop.f32.mrb[0].mxu0
        %v1977 = vadd.f32 %v1818, %v1976
        %v1978 = vpop.f32.mrb[0].mxu0
        %1979 = vdwg.mxu0
        %v1980 = vmax.f32 %v1887, 0.0
        %v1981 = vmax.f32 %v1892, 0.0
        %v1982 = vmax.f32 %v1897, 0.0
        %v1983 = vmax.f32 %v1902, 0.0
        %v1984 = vmax.f32 %v1907, 0.0
        %v1985 = vmax.f32 %v1912, 0.0
        %v1986 = vmax.f32 %v1917, 0.0
        %v1987 = vmax.f32 %v1922, 0.0
        %v1988 = vmax.f32 %v1927, 0.0
        %v1989 = vmax.f32 %v1932, 0.0
        %v1990 = vmax.f32 %v1937, 0.0
        %v1991 = vmax.f32 %v1942, 0.0
        %v1992 = vmax.f32 %v1947, 0.0
        %v1993 = vmax.f32 %v1952, 0.0
        %v1994 = vmax.f32 %v1957, 0.0
        %v1995 = vmax.f32 %v1962, 0.0
        %v1996 = vmax.f32 %v1967, 0.0
        %v1997 = vmax.f32 %v1972, 0.0
        %v1998 = vmax.f32 %v1977, 0.0
        %v1999 = vld [vmem:[%s13] sm:$0xff]
        %v2000 = vld [vmem:[%s13 + $0x8] sm:$0xff]
        %v2001 = vld [vmem:[%s13 + $0x10] sm:$0xff]
        %v2002 = vld [vmem:[%s13 + $0x18] sm:$0xff]
        %v2003 = vld [vmem:[%s13 + $0x20] sm:$0xff]
        %v2004 = vld [vmem:[%s13 + $0x28] sm:$0xff]
        %v2005 = vld [vmem:[%s13 + $0x30] sm:$0xff]
        %v2006 = vld [vmem:[%s13 + $0x38] sm:$0xff]
        %v2007 = vld [vmem:[%s13 + $0x40] sm:$0xff]
        %v2008 = vld [vmem:[%s13 + $0x48] sm:$0xff]
        %v2009 = vld [vmem:[%s13 + $0x50] sm:$0xff]
        %v2010 = vld [vmem:[%s13 + $0x58] sm:$0xff]
        %v2011 = vld [vmem:[%s13 + $0x60] sm:$0xff]
        %v2012 = vld [vmem:[%s13 + $0x68] sm:$0xff]
        %v2013 = vld [vmem:[%s13 + $0x70] sm:$0xff]
        %v2014 = vld [vmem:[%s13 + $0x78] sm:$0xff]
        %v2015 = vld [vmem:[%s14] sm:$0x1]
        %v2017 = vlaneseq
        %v2018 = vshrl.u32 %v2017, 7
        %v2019 = vsub.s32 0, %v2018
        %v2020 = vrot.slane %v2015, %v2019
        %2022 = vmatprep.subr.mxu0 0.0
        %2023 = vmatpush1.msra.mxu0 %v1999
        %2024 = vmatprep.subr.mxu0 0.0
        %2025 = vmatpush1.msra.mxu0 %v2000
        %2026 = vmatprep.subr.mxu0 0.0
        %2027 = vmatpush1.msra.mxu0 %v2001
        %2028 = vmatprep.subr.mxu0 0.0
        %2029 = vmatpush1.msra.mxu0 %v2002
        %2030 = vmatprep.subr.mxu0 0.0
        %2031 = vmatpush1.msra.mxu0 %v2003
        %2032 = vmatprep.subr.mxu0 0.0
        %2033 = vmatpush1.msra.mxu0 %v2004
        %2034 = vmatprep.subr.mxu0 0.0
        %2035 = vmatpush1.msra.mxu0 %v2005
        %2036 = vmatprep.subr.mxu0 0.0
        %2037 = vmatpush1.msra.mxu0 %v2006
        %2038 = vmatprep.subr.mxu0 0.0
        %2039 = vmatpush1.msra.mxu0 %v2007
        %2040 = vmatprep.subr.mxu0 0.0
        %2041 = vmatpush1.msra.mxu0 %v2008
        %2042 = vmatprep.subr.mxu0 0.0
        %2043 = vmatpush1.msra.mxu0 %v2009
        %2044 = vmatprep.subr.mxu0 0.0
        %2045 = vmatpush1.msra.mxu0 %v2010
        %2046 = vmatprep.subr.mxu0 0.0
        %2047 = vmatpush1.msra.mxu0 %v2011
        %2048 = vmatprep.subr.mxu0 0.0
        %2049 = vmatpush1.msra.mxu0 %v2012
        %2050 = vmatprep.subr.mxu0 0.0
        %2051 = vmatpush1.msra.mxu0 %v2013
        %2052 = vmatprep.subr.mxu0 0.0
        %2053 = vmatpush1.msra.mxu0 %v2014
        %2054 = vmatprep.subr.mxu0 0.0
        %2055 = vmatpush1.msra.mxu0 0.0
        %2056 = vmatprep.subr.mxu0 0.0
        %2057 = vmatpush1.msra.mxu0 0.0
        %2058 = vmatprep.subr.mxu0 0.0
        %2059 = vmatpush1.msra.mxu0 0.0
        %2060 = vmatprep.subr.mxu0 0.0
        %2061 = vmatpush1.msra.mxu0 0.0
        %2062 = vmatprep.subr.mxu0 0.0
        %2063 = vmatpush1.msra.mxu0 0.0
        %2064 = vmatprep.subr.mxu0 0.0
        %2065 = vmatpush1.msra.mxu0 0.0
        %2066 = vmatprep.subr.mxu0 0.0
        %2067 = vmatpush1.msra.mxu0 0.0
        %2068 = vmatprep.subr.mxu0 0.0
        %2069 = vmatpush1.msra.mxu0 0.0
        %2070 = vmatprep.subr.mxu0 0.0
        %2071 = vmatpush1.msra.mxu0 0.0
        %2072 = vmatprep.subr.mxu0 0.0
        %2073 = vmatpush1.msra.mxu0 0.0
        %2074 = vmatprep.subr.mxu0 0.0
        %2075 = vmatpush1.msra.mxu0 0.0
        %2076 = vmatprep.subr.mxu0 0.0
        %2077 = vmatpush1.msra.mxu0 0.0
        %2078 = vmatprep.subr.mxu0 0.0
        %2079 = vmatpush1.msra.mxu0 0.0
        %2080 = vmatprep.subr.mxu0 0.0
        %2081 = vmatpush1.msra.mxu0 0.0
        %2082 = vmatprep.subr.mxu0 0.0
        %2083 = vmatpush1.msra.mxu0 0.0
        %2084 = vmatprep.subr.mxu0 0.0
        %2085 = vmatpush1.msra.mxu0 0.0
        %2086 = vmatprep.mubr.f32.mxu0 0.0
        %2087 = vmatmul.mubr.f32.gmra.mrb[0].mxu0 %v1980
        %v2088 = vpop.f32.mrb[0].mxu0
        %v2089 = vadd.f32 %v2020, %v2088
        %v2090 = vpop.f32.mrb[0].mxu0
        %2091 = vmatprep.mubr.f32.mxu0 0.0
        %2092 = vmatmul.mubr.f32.gmra.mrb[0].mxu0 %v1981
        %v2093 = vpop.f32.mrb[0].mxu0
        %v2094 = vadd.f32 %v2020, %v2093
        %v2095 = vpop.f32.mrb[0].mxu0
        %2096 = vmatprep.mubr.f32.mxu0 0.0
        %2097 = vmatmul.mubr.f32.gmra.mrb[0].mxu0 %v1982
        %v2098 = vpop.f32.mrb[0].mxu0
        %v2099 = vadd.f32 %v2020, %v2098
        %v2100 = vpop.f32.mrb[0].mxu0
        %2101 = vmatprep.mubr.f32.mxu0 0.0
        %2102 = vmatmul.mubr.f32.gmra.mrb[0].mxu0 %v1983
        %v2103 = vpop.f32.mrb[0].mxu0
        %v2104 = vadd.f32 %v2020, %v2103
        %v2105 = vpop.f32.mrb[0].mxu0
        %2106 = vmatprep.mubr.f32.mxu0 0.0
        %2107 = vmatmul.mubr.f32.gmra.mrb[0].mxu0 %v1984
        %v2108 = vpop.f32.mrb[0].mxu0
        %v2109 = vadd.f32 %v2020, %v2108
        %v2110 = vpop.f32.mrb[0].mxu0
        %2111 = vmatprep.mubr.f32.mxu0 0.0
        %2112 = vmatmul.mubr.f32.gmra.mrb[0].mxu0 %v1985
        %v2113 = vpop.f32.mrb[0].mxu0
        %v2114 = vadd.f32 %v2020, %v2113
        %v2115 = vpop.f32.mrb[0].mxu0
        %2116 = vmatprep.mubr.f32.mxu0 0.0
        %2117 = vmatmul.mubr.f32.gmra.mrb[0].mxu0 %v1986
        %v2118 = vpop.f32.mrb[0].mxu0
        %v2119 = vadd.f32 %v2020, %v2118
        %v2120 = vpop.f32.mrb[0].mxu0
        %2121 = vmatprep.mubr.f32.mxu0 0.0
        %2122 = vmatmul.mubr.f32.gmra.mrb[0].mxu0 %v1987
        %v2123 = vpop.f32.mrb[0].mxu0
        %v2124 = vadd.f32 %v2020, %v2123
        %v2125 = vpop.f32.mrb[0].mxu0
        %2126 = vmatprep.mubr.f32.mxu0 0.0
        %2127 = vmatmul.mubr.f32.gmra.mrb[0].mxu0 %v1988
        %v2128 = vpop.f32.mrb[0].mxu0
        %v2129 = vadd.f32 %v2020, %v2128
        %v2130 = vpop.f32.mrb[0].mxu0
        %2131 = vmatprep.mubr.f32.mxu0 0.0
        %2132 = vmatmul.mubr.f32.gmra.mrb[0].mxu0 %v1989
        %v2133 = vpop.f32.mrb[0].mxu0
        %v2134 = vadd.f32 %v2020, %v2133
        %v2135 = vpop.f32.mrb[0].mxu0
        %2136 = vmatprep.mubr.f32.mxu0 0.0
        %2137 = vmatmul.mubr.f32.gmra.mrb[0].mxu0 %v1990
        %v2138 = vpop.f32.mrb[0].mxu0
        %v2139 = vadd.f32 %v2020, %v2138
        %v2140 = vpop.f32.mrb[0].mxu0
        %2141 = vmatprep.mubr.f32.mxu0 0.0
        %2142 = vmatmul.mubr.f32.gmra.mrb[0].mxu0 %v1991
        %v2143 = vpop.f32.mrb[0].mxu0
        %v2144 = vadd.f32 %v2020, %v2143
        %v2145 = vpop.f32.mrb[0].mxu0
        %2146 = vmatprep.mubr.f32.mxu0 0.0
        %2147 = vmatmul.mubr.f32.gmra.mrb[0].mxu0 %v1992
        %v2148 = vpop.f32.mrb[0].mxu0
        %v2149 = vadd.f32 %v2020, %v2148
        %v2150 = vpop.f32.mrb[0].mxu0
        %2151 = vmatprep.mubr.f32.mxu0 0.0
        %2152 = vmatmul.mubr.f32.gmra.mrb[0].mxu0 %v1993
        %v2153 = vpop.f32.mrb[0].mxu0
        %v2154 = vadd.f32 %v2020, %v2153
        %v2155 = vpop.f32.mrb[0].mxu0
        %2156 = vmatprep.mubr.f32.mxu0 0.0
        %2157 = vmatmul.mubr.f32.gmra.mrb[0].mxu0 %v1994
        %v2158 = vpop.f32.mrb[0].mxu0
        %v2159 = vadd.f32 %v2020, %v2158
        %v2160 = vpop.f32.mrb[0].mxu0
        %2161 = vmatprep.mubr.f32.mxu0 0.0
        %2162 = vmatmul.mubr.f32.gmra.mrb[0].mxu0 %v1995
        %v2163 = vpop.f32.mrb[0].mxu0
        %v2164 = vadd.f32 %v2020, %v2163
        %v2165 = vpop.f32.mrb[0].mxu0
        %2166 = vmatprep.mubr.f32.mxu0 0.0
        %2167 = vmatmul.mubr.f32.gmra.mrb[0].mxu0 %v1996
        %v2168 = vpop.f32.mrb[0].mxu0
        %v2169 = vadd.f32 %v2020, %v2168
        %v2170 = vpop.f32.mrb[0].mxu0
        %2171 = vmatprep.mubr.f32.mxu0 0.0
        %2172 = vmatmul.mubr.f32.gmra.mrb[0].mxu0 %v1997
        %v2173 = vpop.f32.mrb[0].mxu0
        %v2174 = vadd.f32 %v2020, %v2173
        %v2175 = vpop.f32.mrb[0].mxu0
        %2176 = vmatprep.mubr.f32.mxu0 0.0
        %2177 = vmatmul.mubr.f32.gmra.mrb[0].mxu0 %v1998
        %v2178 = vpop.f32.mrb[0].mxu0
        %v2179 = vadd.f32 %v2020, %v2178
        %v2180 = vpop.f32.mrb[0].mxu0
        %2181 = vdwg.mxu0
        %v2182 = vmax.f32 %v2089, 0.0
        %v2183 = vmax.f32 %v2094, 0.0
        %v2184 = vmax.f32 %v2099, 0.0
        %v2185 = vmax.f32 %v2104, 0.0
        %v2186 = vmax.f32 %v2109, 0.0
        %v2187 = vmax.f32 %v2114, 0.0
        %v2188 = vmax.f32 %v2119, 0.0
        %v2189 = vmax.f32 %v2124, 0.0
        %v2190 = vmax.f32 %v2129, 0.0
        %v2191 = vmax.f32 %v2134, 0.0
        %v2192 = vmax.f32 %v2139, 0.0
        %v2193 = vmax.f32 %v2144, 0.0
        %v2194 = vmax.f32 %v2149, 0.0
        %v2195 = vmax.f32 %v2154, 0.0
        %v2196 = vmax.f32 %v2159, 0.0
        %v2197 = vmax.f32 %v2164, 0.0
        %v2198 = vmax.f32 %v2169, 0.0
        %v2199 = vmax.f32 %v2174, 0.0
        %v2200 = vmax.f32 %v2179, 0.0
        %v2201 = vld [vmem:[%s15] sm:$0xff]
        %v2202 = vld [vmem:[%s15 + $0x8] sm:$0xff]
        %v2203 = vld [vmem:[%s15 + $0x10] sm:$0xff]
        %v2204 = vld [vmem:[%s15 + $0x18] sm:$0xff]
        %v2205 = vld [vmem:[%s15 + $0x20] sm:$0xff]
        %v2206 = vld [vmem:[%s15 + $0x28] sm:$0xff]
        %v2207 = vld [vmem:[%s15 + $0x30] sm:$0xff]
        %v2208 = vld [vmem:[%s15 + $0x38] sm:$0xff]
        %v2209 = vld [vmem:[%s15 + $0x40] sm:$0xff]
        %v2210 = vld [vmem:[%s15 + $0x48] sm:$0xff]
        %v2211 = vld [vmem:[%s15 + $0x50] sm:$0xff]
        %v2212 = vld [vmem:[%s15 + $0x58] sm:$0xff]
        %v2213 = vld [vmem:[%s15 + $0x60] sm:$0xff]
        %v2214 = vld [vmem:[%s15 + $0x68] sm:$0xff]
        %v2215 = vld [vmem:[%s15 + $0x70] sm:$0xff]
        %v2216 = vld [vmem:[%s15 + $0x78] sm:$0xff]
        %v2217 = vld [vmem:[%s16] sm:$0x1]
        %v2219 = vlaneseq
        %v2220 = vshrl.u32 %v2219, 7
        %v2221 = vsub.s32 0, %v2220
        %v2222 = vrot.slane %v2217, %v2221
        %2224 = vmatprep.subr.mxu0 0.0
        %2225 = vmatpush1.msra.mxu0 %v2201
        %2226 = vmatprep.subr.mxu0 0.0
        %2227 = vmatpush1.msra.mxu0 %v2202
        %2228 = vmatprep.subr.mxu0 0.0
        %2229 = vmatpush1.msra.mxu0 %v2203
        %2230 = vmatprep.subr.mxu0 0.0
        %2231 = vmatpush1.msra.mxu0 %v2204
        %2232 = vmatprep.subr.mxu0 0.0
        %2233 = vmatpush1.msra.mxu0 %v2205
        %2234 = vmatprep.subr.mxu0 0.0
        %2235 = vmatpush1.msra.mxu0 %v2206
        %2236 = vmatprep.subr.mxu0 0.0
        %2237 = vmatpush1.msra.mxu0 %v2207
        %2238 = vmatprep.subr.mxu0 0.0
        %2239 = vmatpush1.msra.mxu0 %v2208
        %2240 = vmatprep.subr.mxu0 0.0
        %2241 = vmatpush1.msra.mxu0 %v2209
        %2242 = vmatprep.subr.mxu0 0.0
        %2243 = vmatpush1.msra.mxu0 %v2210
        %2244 = vmatprep.subr.mxu0 0.0
        %2245 = vmatpush1.msra.mxu0 %v2211
        %2246 = vmatprep.subr.mxu0 0.0
        %2247 = vmatpush1.msra.mxu0 %v2212
        %2248 = vmatprep.subr.mxu0 0.0
        %2249 = vmatpush1.msra.mxu0 %v2213
        %2250 = vmatprep.subr.mxu0 0.0
        %2251 = vmatpush1.msra.mxu0 %v2214
        %2252 = vmatprep.subr.mxu0 0.0
        %2253 = vmatpush1.msra.mxu0 %v2215
        %2254 = vmatprep.subr.mxu0 0.0
        %2255 = vmatpush1.msra.mxu0 %v2216
        %2256 = vmatprep.subr.mxu0 0.0
        %2257 = vmatpush1.msra.mxu0 0.0
        %2258 = vmatprep.subr.mxu0 0.0
        %2259 = vmatpush1.msra.mxu0 0.0
        %2260 = vmatprep.subr.mxu0 0.0
        %2261 = vmatpush1.msra.mxu0 0.0
        %2262 = vmatprep.subr.mxu0 0.0
        %2263 = vmatpush1.msra.mxu0 0.0
        %2264 = vmatprep.subr.mxu0 0.0
        %2265 = vmatpush1.msra.mxu0 0.0
        %2266 = vmatprep.subr.mxu0 0.0
        %2267 = vmatpush1.msra.mxu0 0.0
        %2268 = vmatprep.subr.mxu0 0.0
        %2269 = vmatpush1.msra.mxu0 0.0
        %2270 = vmatprep.subr.mxu0 0.0
        %2271 = vmatpush1.msra.mxu0 0.0
        %2272 = vmatprep.subr.mxu0 0.0
        %2273 = vmatpush1.msra.mxu0 0.0
        %2274 = vmatprep.subr.mxu0 0.0
        %2275 = vmatpush1.msra.mxu0 0.0
        %2276 = vmatprep.subr.mxu0 0.0
        %2277 = vmatpush1.msra.mxu0 0.0
        %2278 = vmatprep.subr.mxu0 0.0
        %2279 = vmatpush1.msra.mxu0 0.0
        %2280 = vmatprep.subr.mxu0 0.0
        %2281 = vmatpush1.msra.mxu0 0.0
        %2282 = vmatprep.subr.mxu0 0.0
        %2283 = vmatpush1.msra.mxu0 0.0
        %2284 = vmatprep.subr.mxu0 0.0
        %2285 = vmatpush1.msra.mxu0 0.0
        %2286 = vmatprep.subr.mxu0 0.0
        %2287 = vmatpush1.msra.mxu0 0.0
        %2288 = vmatprep.mubr.f32.mxu0 0.0
        %2289 = vmatmul.mubr.f32.gmra.mrb[0].mxu0 %v2182
        %v2290 = vpop.f32.mrb[0].mxu0
        %v2291 = vadd.f32 %v2222, %v2290
        %v2292 = vpop.f32.mrb[0].mxu0
        %2293 = vmatprep.mubr.f32.mxu0 0.0
        %2294 = vmatmul.mubr.f32.gmra.mrb[0].mxu0 %v2183
        %v2295 = vpop.f32.mrb[0].mxu0
        %v2296 = vadd.f32 %v2222, %v2295
        %v2297 = vpop.f32.mrb[0].mxu0
        %2298 = vmatprep.mubr.f32.mxu0 0.0
        %2299 = vmatmul.mubr.f32.gmra.mrb[0].mxu0 %v2184
        %v2300 = vpop.f32.mrb[0].mxu0
        %v2301 = vadd.f32 %v2222, %v2300
        %v2302 = vpop.f32.mrb[0].mxu0
        %2303 = vmatprep.mubr.f32.mxu0 0.0
        %2304 = vmatmul.mubr.f32.gmra.mrb[0].mxu0 %v2185
        %v2305 = vpop.f32.mrb[0].mxu0
        %v2306 = vadd.f32 %v2222, %v2305
        %v2307 = vpop.f32.mrb[0].mxu0
        %2308 = vmatprep.mubr.f32.mxu0 0.0
        %2309 = vmatmul.mubr.f32.gmra.mrb[0].mxu0 %v2186
        %v2310 = vpop.f32.mrb[0].mxu0
        %v2311 = vadd.f32 %v2222, %v2310
        %v2312 = vpop.f32.mrb[0].mxu0
        %2313 = vmatprep.mubr.f32.mxu0 0.0
        %2314 = vmatmul.mubr.f32.gmra.mrb[0].mxu0 %v2187
        %v2315 = vpop.f32.mrb[0].mxu0
        %v2316 = vadd.f32 %v2222, %v2315
        %v2317 = vpop.f32.mrb[0].mxu0
        %2318 = vmatprep.mubr.f32.mxu0 0.0
        %2319 = vmatmul.mubr.f32.gmra.mrb[0].mxu0 %v2188
        %v2320 = vpop.f32.mrb[0].mxu0
        %v2321 = vadd.f32 %v2222, %v2320
        %v2322 = vpop.f32.mrb[0].mxu0
        %2323 = vmatprep.mubr.f32.mxu0 0.0
        %2324 = vmatmul.mubr.f32.gmra.mrb[0].mxu0 %v2189
        %v2325 = vpop.f32.mrb[0].mxu0
        %v2326 = vadd.f32 %v2222, %v2325
        %v2327 = vpop.f32.mrb[0].mxu0
        %2328 = vmatprep.mubr.f32.mxu0 0.0
        %2329 = vmatmul.mubr.f32.gmra.mrb[0].mxu0 %v2190
        %v2330 = vpop.f32.mrb[0].mxu0
        %v2331 = vadd.f32 %v2222, %v2330
        %v2332 = vpop.f32.mrb[0].mxu0
        %2333 = vmatprep.mubr.f32.mxu0 0.0
        %2334 = vmatmul.mubr.f32.gmra.mrb[0].mxu0 %v2191
        %v2335 = vpop.f32.mrb[0].mxu0
        %v2336 = vadd.f32 %v2222, %v2335
        %v2337 = vpop.f32.mrb[0].mxu0
        %2338 = vmatprep.mubr.f32.mxu0 0.0
        %2339 = vmatmul.mubr.f32.gmra.mrb[0].mxu0 %v2192
        %v2340 = vpop.f32.mrb[0].mxu0
        %v2341 = vadd.f32 %v2222, %v2340
        %v2342 = vpop.f32.mrb[0].mxu0
        %2343 = vmatprep.mubr.f32.mxu0 0.0
        %2344 = vmatmul.mubr.f32.gmra.mrb[0].mxu0 %v2193
        %v2345 = vpop.f32.mrb[0].mxu0
        %v2346 = vadd.f32 %v2222, %v2345
        %v2347 = vpop.f32.mrb[0].mxu0
        %2348 = vmatprep.mubr.f32.mxu0 0.0
        %2349 = vmatmul.mubr.f32.gmra.mrb[0].mxu0 %v2194
        %v2350 = vpop.f32.mrb[0].mxu0
        %v2351 = vadd.f32 %v2222, %v2350
        %v2352 = vpop.f32.mrb[0].mxu0
        %2353 = vmatprep.mubr.f32.mxu0 0.0
        %2354 = vmatmul.mubr.f32.gmra.mrb[0].mxu0 %v2195
        %v2355 = vpop.f32.mrb[0].mxu0
        %v2356 = vadd.f32 %v2222, %v2355
        %v2357 = vpop.f32.mrb[0].mxu0
        %2358 = vmatprep.mubr.f32.mxu0 0.0
        %2359 = vmatmul.mubr.f32.gmra.mrb[0].mxu0 %v2196
        %v2360 = vpop.f32.mrb[0].mxu0
        %v2361 = vadd.f32 %v2222, %v2360
        %v2362 = vpop.f32.mrb[0].mxu0
        %2363 = vmatprep.mubr.f32.mxu0 0.0
        %2364 = vmatmul.mubr.f32.gmra.mrb[0].mxu0 %v2197
        %v2365 = vpop.f32.mrb[0].mxu0
        %v2366 = vadd.f32 %v2222, %v2365
        %v2367 = vpop.f32.mrb[0].mxu0
        %2368 = vmatprep.mubr.f32.mxu0 0.0
        %2369 = vmatmul.mubr.f32.gmra.mrb[0].mxu0 %v2198
        %v2370 = vpop.f32.mrb[0].mxu0
        %v2371 = vadd.f32 %v2222, %v2370
        %v2372 = vpop.f32.mrb[0].mxu0
        %2373 = vmatprep.mubr.f32.mxu0 0.0
        %2374 = vmatmul.mubr.f32.gmra.mrb[0].mxu0 %v2199
        %v2375 = vpop.f32.mrb[0].mxu0
        %v2376 = vadd.f32 %v2222, %v2375
        %v2377 = vpop.f32.mrb[0].mxu0
        %2378 = vmatprep.mubr.f32.mxu0 0.0
        %2379 = vmatmul.mubr.f32.gmra.mrb[0].mxu0 %v2200
        %v2380 = vpop.f32.mrb[0].mxu0
        %v2381 = vadd.f32 %v2222, %v2380
        %v2382 = vpop.f32.mrb[0].mxu0
        %2383 = vdwg.mxu0
        %2384 = vst [vmem:[%s690] sm:$0xff] %v2291
        %2385 = vst [vmem:[%s690 + $0x8] sm:$0xff] %v2296
        %2386 = vst [vmem:[%s690 + $0x10] sm:$0xff] %v2301
        %2387 = vst [vmem:[%s690 + $0x18] sm:$0xff] %v2306
        %2388 = vst [vmem:[%s690 + $0x20] sm:$0xff] %v2311
        %2389 = vst [vmem:[%s690 + $0x28] sm:$0xff] %v2316
        %2390 = vst [vmem:[%s690 + $0x30] sm:$0xff] %v2321
        %2391 = vst [vmem:[%s690 + $0x38] sm:$0xff] %v2326
        %2392 = vst [vmem:[%s690 + $0x40] sm:$0xff] %v2331
        %2393 = vst [vmem:[%s690 + $0x48] sm:$0xff] %v2336
        %2394 = vst [vmem:[%s690 + $0x50] sm:$0xff] %v2341
        %2395 = vst [vmem:[%s690 + $0x58] sm:$0xff] %v2346
        %2396 = vst [vmem:[%s690 + $0x60] sm:$0xff] %v2351
        %2397 = vst [vmem:[%s690 + $0x68] sm:$0xff] %v2356
        %2398 = vst [vmem:[%s690 + $0x70] sm:$0xff] %v2361
        %2399 = vst [vmem:[%s690 + $0x78] sm:$0xff] %v2366
        %2400 = vst [vmem:[%s690 + $0x80] sm:$0xff] %v2371
        %2401 = vst [vmem:[%s690 + $0x88] sm:$0xff] %v2376
        %2402 = vst [vmem:[%s690 + $0x90] sm:$0xff] %v2381
        %s2403 = smul.u32 19, %s36
        %p2404 = scmp.lt.s32.totalorder %s2403, 37
        %s2405 = scalar_select %p2404, %s2403, 37
        %s2406 = smul.addr %s2405, 8
        %s2407 = scalar_lea.vmem %s17, %s2406
        %s2408 = smul.u32 19, %s36
        %p2409 = scmp.lt.s32.totalorder %s2408, 37
        %s2410 = scalar_select %p2409, %s2408, 37
        %s2411 = smul.addr %s2410, 8
        %s2412 = scalar_lea.vmem %s18, %s2411
        %s2413 = smul.u32 19, %s36
        %p2414 = scmp.lt.s32.totalorder %s2413, 37
        %s2415 = scalar_select %p2414, %s2413, 37
        %s2416 = smul.addr %s2415, 8
        %s2417 = scalar_lea.vmem %s19, %s2416
        %s2418 = sand.u32 %s484, 1
        %s2419 = scalar_lea.sflag [#allocation3], %s2418
        %s2420 = sand.u32 %s484, 1
        %s2421 = smul.addr %s2420, 152
        %s2422 = scalar_lea.vmem [#allocation2], %s2421
        %s2423 = smul.u32 19, %s36
        %p2424 = scmp.lt.s32.totalorder %s2423, 37
        %s2425 = scalar_select %p2424, %s2423, 37
        %s2426 = smul.addr %s2425, 8
        %s2427 = scalar_lea.vmem %s21, %s2426
        // Predicated region
        $region89: #{ae_forward.1} parent=87 // pred_check
          %p2428 = pneg %p416
        $region90: #{ae_forward.1} parent=87 // pred_check_branch
          %2430 = sbr.rel (%p2428) target = $region92
        $region91: #{ae_forward.1} parent=87 // pred_region
          %s2431 = smul.u32 19, %s36
        $region92: #{ae_forward.1} parent=87 // pred_fallthru
          _
        // Predicated region
        $region93: #{ae_forward.1} parent=87 // pred_check
          %p2432 = pneg %p442
        $region94: #{ae_forward.1} parent=87 // pred_check_branch
          %2434 = sbr.rel (%p2432) target = $region96
        $region95: #{ae_forward.1} parent=87 // pred_region
          %s2435 = smul.u32 19, %s36
        $region96: #{ae_forward.1} parent=87 // pred_fallthru
          _
        // Predicated region
        $region97: #{ae_forward.1} parent=87 // pred_check
          %p2436 = pneg %p468
        $region98: #{ae_forward.1} parent=87 // pred_check_branch
          %2438 = sbr.rel (%p2436) target = $region100
        $region99: #{ae_forward.1} parent=87 // pred_region
          %s2439 = smul.u32 19, %s36
        $region100: #{ae_forward.1} parent=87 // pred_fallthru
          _
        // Predicated region
        $region101: #{ae_forward.1} parent=87 // pred_check
          %p2440 = pneg %p494
        $region102: #{ae_forward.1} parent=87 // pred_check_branch
          %2442 = sbr.rel (%p2440) target = $region104
        $region103: #{ae_forward.1} parent=87 // pred_region
          %s2443 = smul.u32 19, %s36
          %s2445 = ssub.s32 2432, 2432
          %2446 = vsyncadd %s2419, %s2445
          %s2447 = smul.addr %s2443, 128
          %s2448 = scalar_lea.hbm %s20, %s2447
          %s2449 = sshll.u32 %s2422, 4
          %s2450 = int_to_ptr.vmem [resolvable:$true] %s2449
          %2455 = dma.vmem_to_hbm [thread:$0]  %s2450, 2432, %s2448, %s2419, 128, 128, 8
        $region104: #{ae_forward.1} parent=87 // pred_fallthru
          _
        // Predicated region
        $region105: #{ae_forward.1} parent=87 // pred_check
          %p2456 = pneg %p520
        $region106: #{ae_forward.1} parent=87 // pred_check_branch
          %2458 = sbr.rel (%p2456) target = $region108
        $region107: #{ae_forward.1} parent=87 // pred_region
          %s2459 = smul.u32 19, %s36
        $region108: #{ae_forward.1} parent=87 // pred_fallthru
          _
      $region88: #{ae_forward.1} parent=5 // pred_fallthru
        _
      %p2460 = scmp.le.s32.totalorder 2, %s31
      // Predicated region
      $region109: #{ae_forward.1} parent=5 // pred_check
        %p2461 = pneg %p2460
      $region110: #{ae_forward.1} parent=5 // pred_check_branch
        %2463 = sbr.rel (%p2461) target = $region112
      $region111: #{ae_forward.1} parent=5 // pred_region
        %s2464 = ssub.s32 %s31, 2
        // Predicated region
        $region113: #{ae_forward.1} parent=111 // pred_check
          %p2465 = pneg %p422
        $region114: #{ae_forward.1} parent=111 // pred_check_branch
          %2467 = sbr.rel (%p2465) target = $region116
        $region115: #{ae_forward.1} parent=111 // pred_region
          %s2468 = smul.u32 19, %s37
          %p2469 = scmp.lt.s32.totalorder %s2468, 37
          %s2470 = scalar_select %p2469, %s2468, 37
          %s2471 = smul.addr %s2470, 8
          %s2472 = scalar_lea.vmem %s17, %s2471
        $region116: #{ae_forward.1} parent=111 // pred_fallthru
          _
        // Predicated region
        $region117: #{ae_forward.1} parent=111 // pred_check
          %p2473 = pneg %p448
        $region118: #{ae_forward.1} parent=111 // pred_check_branch
          %2475 = sbr.rel (%p2473) target = $region120
        $region119: #{ae_forward.1} parent=111 // pred_region
          %s2476 = smul.u32 19, %s37
          %p2477 = scmp.lt.s32.totalorder %s2476, 37
          %s2478 = scalar_select %p2477, %s2476, 37
          %s2479 = smul.addr %s2478, 8
          %s2480 = scalar_lea.vmem %s18, %s2479
        $region120: #{ae_forward.1} parent=111 // pred_fallthru
          _
        // Predicated region
        $region121: #{ae_forward.1} parent=111 // pred_check
          %p2481 = pneg %p474
        $region122: #{ae_forward.1} parent=111 // pred_check_branch
          %2483 = sbr.rel (%p2481) target = $region124
        $region123: #{ae_forward.1} parent=111 // pred_region
          %s2484 = smul.u32 19, %s37
          %p2485 = scmp.lt.s32.totalorder %s2484, 37
          %s2486 = scalar_select %p2485, %s2484, 37
          %s2487 = smul.addr %s2486, 8
          %s2488 = scalar_lea.vmem %s19, %s2487
        $region124: #{ae_forward.1} parent=111 // pred_fallthru
          _
        // Predicated region
        $region125: #{ae_forward.1} parent=111 // pred_check
          %p2489 = pneg %p500
        $region126: #{ae_forward.1} parent=111 // pred_check_branch
          %2491 = sbr.rel (%p2489) target = $region128
        $region127: #{ae_forward.1} parent=111 // pred_region
          %s2492 = sand.u32 %s485, 1
          %s2493 = scalar_lea.sflag [#allocation3], %s2492
          %s2494 = sand.u32 %s485, 1
          %s2495 = smul.addr %s2494, 152
          %s2496 = scalar_lea.vmem [#allocation2], %s2495
          %2497 = dma.done %s2493, 2432
        $region128: #{ae_forward.1} parent=111 // pred_fallthru
          _
        // Predicated region
        $region129: #{ae_forward.1} parent=111 // pred_check
          %p2498 = pneg %p526
        $region130: #{ae_forward.1} parent=111 // pred_check_branch
          %2500 = sbr.rel (%p2498) target = $region132
        $region131: #{ae_forward.1} parent=111 // pred_region
          %s2501 = smul.u32 19, %s37
          %p2502 = scmp.lt.s32.totalorder %s2501, 37
          %s2503 = scalar_select %p2502, %s2501, 37
          %s2504 = smul.addr %s2503, 8
          %s2505 = scalar_lea.vmem %s21, %s2504
        $region132: #{ae_forward.1} parent=111 // pred_fallthru
          _
      $region112: #{ae_forward.1} parent=5 // pred_fallthru
        _
    $region6: #{ae_forward.1} parent=1 // loop_footer
      %s35 = sadd.s32 1, %s31
    $region7: #{ae_forward.1} parent=1 // loop_footer_branch
      %30 = sbr.rel target = $region3
    $region8: #{ae_forward.1} parent=1 // loop_exit
      _
    %2506 = vsyncpa [#allocation3], 1
    %s2507 = scalar_lea.sflag [#allocation3], 1
    %2508 = vsyncpa %s2507, 1

</llo_original>
